<compile_context>
chip_gen: v6e
topology: v6e:2x2x1
jax: 0.10.0
libtpu: 0.0.40
codegen_flags: <defaults>
</compile_context>

<pallas_src>
import functools
import math

import jax
import jax.numpy as jnp
from jax.experimental import pallas as pl
from jax.experimental.pallas import tpu as pltpu


# ---------------------------------------------------------------------------
# shared math helpers (kernel + host) - f32 math
# ---------------------------------------------------------------------------
def _layernorm(x, g, b, eps=1e-12):
    mu = jnp.mean(x, axis=-1, keepdims=True)
    var = jnp.mean((x - mu) ** 2, axis=-1, keepdims=True)
    return (x - mu) * jax.lax.rsqrt(var + eps) * g + b


def _gelu(x):
    # tanh approximation of GELU (EUP-friendly), kept in f32
    c = jnp.float32(0.7978845608028654)  # sqrt(2/pi)
    return 0.5 * x * (1.0 + jnp.tanh(c * (x + 0.044715 * x * x * x)))


# ---------------------------------------------------------------------------
# Pallas kernel: one grid step == (one batch element, one transformer layer).
# Hidden state (S, H) for the current batch element lives in a VMEM scratch
# across the layer axis.
# ---------------------------------------------------------------------------
def encoder_kernel(x_ref, mask_ref,
                   wqkv_ref, wo_ref, w1_ref, w2_ref, small_ref,
                   out_ref, h_ref,
                   *, num_heads, head_dim, seq, ffn):
    layer = pl.program_id(1)
    H = num_heads * head_dim

    # layer 0: seed the resident hidden state from the embeddings of batch b
    @pl.when(layer == 0)
    def _():
        h_ref[...] = x_ref[...]

    x = h_ref[...]                               # (S, H) f32, resident in VMEM

    # single packed DMA with all small per-layer params; lane-aligned slices
    small = small_ref[...]                       # (8, P) f32
    bqkv = small[0:1, :3 * H]
    bo   = small[1:2, :H]
    g1   = small[2:3, :H]
    be1  = small[3:4, :H]
    b1   = small[4:5, :ffn]
    b2   = small[5:6, :H]
    g2   = small[6:7, :H]
    be2  = small[7:8, :H]

    wqkv = wqkv_ref[...]                         # (H, 3H) bf16 (Q cols pre-scaled)
    wo = wo_ref[...]                             # (H, H)  bf16
    w1 = w1_ref[...]                             # (H, F)  bf16
    w2 = w2_ref[...]                             # (F, H)  bf16

    # key-padding additive bias built in-kernel: mask 1 -> 0, mask 0 -> -1e9
    kbias = (mask_ref[...] - 1.0) * jnp.float32(1e9)        # (1, S)

    # fused QKV: one MXU push (bf16 x bf16 -> f32 accumulate)
    qkv = jnp.dot(x.astype(jnp.bfloat16), wqkv,
                  preferred_element_type=jnp.float32) + bqkv          # (S, 3H)

    # head-major operands -> batched-over-heads matmuls (no per-head lane cuts)
    q = jnp.swapaxes(qkv[:, :H].reshape(seq, num_heads, head_dim), 0, 1)        # (nh,S,dh)
    k = jnp.swapaxes(qkv[:, H:2 * H].reshape(seq, num_heads, head_dim), 0, 1)   # (nh,S,dh)
    v = jnp.swapaxes(qkv[:, 2 * H:].reshape(seq, num_heads, head_dim), 0, 1)    # (nh,S,dh)

    s = jnp.einsum('hqd,hkd->hqk', q.astype(jnp.bfloat16), k.astype(jnp.bfloat16),
                   preferred_element_type=jnp.float32)                # (nh, S, S)
    s = s + kbias[None, :, :]                                         # pad keys masked
    s = s - jnp.max(s, axis=-1, keepdims=True)
    p = jnp.exp(s)
    denom = jnp.sum(p, axis=-1, keepdims=True)                        # (nh, S, 1), >= 1

    ctx = jnp.einsum('hqk,hkd->hqd', p.astype(jnp.bfloat16), v.astype(jnp.bfloat16),
                     preferred_element_type=jnp.float32)              # (nh, S, dh)
    # deferred softmax denominator: small (nh, S, 1) reciprocal on the EUP
    ctx = ctx * pl.reciprocal(denom, approx=True)
    ctx = jnp.swapaxes(ctx, 0, 1).reshape(seq, H)                     # (S, H)

    attn = jnp.dot(ctx.astype(jnp.bfloat16), wo,
                   preferred_element_type=jnp.float32) + bo
    h1 = _layernorm(x + attn, g1, be1)

    # FFN (bf16 matmuls, f32 GELU / adds)
    ff = jnp.dot(h1.astype(jnp.bfloat16), w1,
                 preferred_element_type=jnp.float32) + b1
    ff = _gelu(ff)
    ff = jnp.dot(ff.astype(jnp.bfloat16), w2,
                 preferred_element_type=jnp.float32) + b2
    h2 = _layernorm(h1 + ff, g2, be2)

    # keep hidden state resident for the next layer
    h_ref[...] = h2

    # last layer: write only the CLS row (== last_hidden_state[b, 0, :])
    @pl.when(layer == pl.num_programs(1) - 1)
    def _():
        out_ref[...] = h2[0:1, :]


def _vmem_budget(H, F, S, P):
    # double-buffered bf16 weights + packed slab + activations + headroom
    w = 2 * 2 * (H * 3 * H + H * H + H * F + F * H)
    slab = 2 * 8 * P * 4
    act = 2 * (S * H + S + H) * 4 + S * H * 4
    temps = 6 * S * max(3 * H, F) * 4
    total = w + slab + act + temps + (4 << 20)
    return int(min(max(total, 32 << 20), 48 << 20))


def encoder_forward(h0, mask, p, *, num_heads):
    """Run the full encoder stack in one pallas_call.

    h0:   (B, S, H) f32 embeddings (post embedding-LayerNorm)
    mask: (B, 1, S) f32 attention mask (1 = real token, 0 = pad)
    Returns (B, H) f32 CLS embeddings.
    """
    B, S, H = h0.shape
    L, _, F = p['w1'].shape
    P = p['small'].shape[-1]
    head_dim = H // num_heads

    def per_layer(shape):
        n = len(shape)
        return pl.BlockSpec((None,) + shape, lambda b, l, _n=n: (l,) + (0,) * _n)

    def per_batch(shape):
        n = len(shape)
        return pl.BlockSpec((None,) + shape, lambda b, l, _n=n: (b,) + (0,) * _n)

    kern = functools.partial(encoder_kernel, num_heads=num_heads,
                             head_dim=head_dim, seq=S, ffn=F)

    out = pl.pallas_call(
        kern,
        out_shape=jax.ShapeDtypeStruct((B, 1, H), jnp.float32),
        grid=(B, L),
        in_specs=[
            per_batch((S, H)),            # embeddings for batch b
            per_batch((1, S)),            # key-pad mask row for batch b
            per_layer((H, 3 * H)),        # Wqkv (bf16, Q-scale folded)
            per_layer((H, H)),            # Wo   (bf16)
            per_layer((H, F)),            # W1   (bf16)
            per_layer((F, H)),            # W2   (bf16)
            per_layer((8, P)),            # packed small params (f32)
        ],
        out_specs=per_batch((1, H)),
        scratch_shapes=[pltpu.VMEM((S, H), jnp.float32)],   # resident hidden state
        compiler_params=pltpu.CompilerParams(
            # batch axis is independent (megacore-shardable on v7x);
            # layers carry state through the scratch -> sequential axis
            dimension_semantics=("parallel", "arbitrary"),
            vmem_limit_bytes=_vmem_budget(H, F, S, P),
        ),
    )(h0, mask, p['wqkv'], p['wo'], p['w1'], p['w2'], p['small'])

    return out[:, 0, :]


# ---------------------------------------------------------------------------
# EmbedText.forward equivalent
# ---------------------------------------------------------------------------
def embed_text_forward(input_ids, attention_mask, params):
    B, S = input_ids.shape

    # embedding lookup (gather) + embedding LayerNorm: plain-JAX glue
    pos = jnp.arange(S)
    h = params['wte'][input_ids] + params['wpe'][pos][None, :, :]
    h = _layernorm(h, params['emb_g'], params['emb_b']).astype(jnp.float32)  # (B,S,H)

    mask = attention_mask.astype(jnp.float32).reshape(B, 1, S)

    # whole encoder stack in one kernel; returns last_hidden_state[:, 0, :]
    return encoder_forward(h, mask, params['stack'], num_heads=params['num_heads'])


# ---------------------------------------------------------------------------
# deterministic synthetic parameter init (replaces from_pretrained)
# big matrices stacked per-layer, bf16; small per-layer params packed f32 slab
# ---------------------------------------------------------------------------
def init_params(key, vocab=100, max_pos=16, H=128, F=512, n_layers=2, num_heads=2):
    ks = jax.random.split(key, 6)

    def nrm(k, shape):
        return jax.random.normal(k, shape, jnp.float32) * 0.02

    head_dim = H // num_heads
    scale = 1.0 / math.sqrt(head_dim)

    wqkv = nrm(ks[2], (n_layers, H, 3 * H))
    # fold 1/sqrt(head_dim) into the Q columns (Q bias is zero, nothing else needed)
    wqkv = wqkv.at[:, :, :H].multiply(scale)

    bqkv = jnp.zeros((n_layers, 3 * H), jnp.float32)
    bo = jnp.zeros((n_layers, H), jnp.float32)
    g1 = jnp.ones((n_layers, H), jnp.float32)
    be1 = jnp.zeros((n_layers, H), jnp.float32)
    b1 = jnp.zeros((n_layers, F), jnp.float32)
    b2 = jnp.zeros((n_layers, H), jnp.float32)
    g2 = jnp.ones((n_layers, H), jnp.float32)
    be2 = jnp.zeros((n_layers, H), jnp.float32)

    P = max(3 * H, F)

    def pad(a):
        return jnp.pad(a, ((0, 0), (0, P - a.shape[-1])))

    # (L, 8, P): one DMA per grid step for all small per-layer params
    small = jnp.stack([pad(bqkv), pad(bo), pad(g1), pad(be1),
                       pad(b1), pad(b2), pad(g2), pad(be2)], axis=1)

    stack = dict(
        wqkv=wqkv.astype(jnp.bfloat16),
        wo=nrm(ks[3], (n_layers, H, H)).astype(jnp.bfloat16),
        w1=nrm(ks[4], (n_layers, H, F)).astype(jnp.bfloat16),
        w2=nrm(ks[5], (n_layers, F, H)).astype(jnp.bfloat16),
        small=small.astype(jnp.float32),
    )
    return dict(
        wte=nrm(ks[0], (vocab, H)),
        wpe=nrm(ks[1], (max_pos, H)),
        emb_g=jnp.ones((H,), jnp.float32),
        emb_b=jnp.zeros((H,), jnp.float32),
        num_heads=num_heads,
        stack=stack,
    )


if __name__ == "__main__":
    key = jax.random.PRNGKey(0)
    pkey, ikey = jax.random.split(key)

    # small but (8,128)-aligned shapes: B=2, S=8, H=128, F=512, 2 layers, 2 heads
    B, S = 2, 8
    H, F, n_layers, num_heads = 128, 512, 2, 2
    params = init_params(pkey, H=H, F=F, n_layers=n_layers, num_heads=num_heads)

    # tokenized_text = {'input_ids': ..., 'attention_mask': ...}
    input_ids = jax.random.randint(ikey, (B, S), 0, 100, dtype=jnp.int32)
    input_ids = input_ids.at[:, 0].set(1)                          # [CLS]-like token
    attention_mask = jnp.ones((B, S), jnp.int32).at[1, 6:].set(0)  # pad tail of item 1

    cls_embeddings = embed_text_forward(input_ids, attention_mask, params)
    cls_embeddings = jax.block_until_ready(cls_embeddings)

    assert cls_embeddings.shape == (B, H)
    assert cls_embeddings.dtype == jnp.float32
    assert bool(jnp.all(jnp.isfinite(cls_embeddings)))
    print("KERNEL_OK")
</pallas_src>

<mosaic_0001>
module attributes {stable_mosaic.version = 11 : i64} {
  func.func @encoder_kernel(%arg0: i32, %arg1: i32, %arg2: memref<1x8x128xf32, #tpu.memory_space<vmem>>, %arg3: memref<1x1x8xf32, #tpu.memory_space<vmem>>, %arg4: memref<1x128x384xbf16, #tpu.memory_space<vmem>>, %arg5: memref<1x128x128xbf16, #tpu.memory_space<vmem>>, %arg6: memref<1x128x512xbf16, #tpu.memory_space<vmem>>, %arg7: memref<1x512x128xbf16, #tpu.memory_space<vmem>>, %arg8: memref<1x8x512xf32, #tpu.memory_space<vmem>>, %arg9: memref<1x1x128xf32, #tpu.memory_space<vmem>>, %arg10: memref<8x128xf32, #tpu.memory_space<vmem>>) attributes {dimension_semantics = [#tpu.dimension_semantics<parallel>, #tpu.dimension_semantics<arbitrary>], iteration_bounds = array<i64: 2, 2>, scalar_prefetch = 0 : i64, scratch_operands = 1 : i64, tpu.core_type = #tpu.core_type<tc>, window_params = [{transform_indices = @transform_0, window_bounds = array<i64: 1, 8, 128>}, {transform_indices = @transform_1, window_bounds = array<i64: 1, 1, 8>}, {transform_indices = @transform_2, window_bounds = array<i64: 1, 128, 384>}, {transform_indices = @transform_3, window_bounds = array<i64: 1, 128, 128>}, {transform_indices = @transform_4, window_bounds = array<i64: 1, 128, 512>}, {transform_indices = @transform_5, window_bounds = array<i64: 1, 512, 128>}, {transform_indices = @transform_6, window_bounds = array<i64: 1, 8, 512>}, {transform_indices = @transform_7, window_bounds = array<i64: 1, 1, 128>}]} {
    %c0_i32 = arith.constant 0 : i32
    %0 = arith.cmpi eq, %arg1, %c0_i32 : i32
    %1 = arith.extui %0 : i1 to i32
    %c0_i32_0 = arith.constant 0 : i32
    %2 = arith.cmpi ne, %1, %c0_i32_0 : i32
    scf.if %2 {
      %c0_46 = arith.constant 0 : index
      %c0_47 = arith.constant 0 : index
      %c0_48 = arith.constant 0 : index
      %137 = vector.load %arg2[%c0_46, %c0_47, %c0_48] : memref<1x8x128xf32, #tpu.memory_space<vmem>>, vector<1x8x128xf32>
      %138 = vector.shape_cast %137 : vector<1x8x128xf32> to vector<8x128xf32>
      %c0_49 = arith.constant 0 : index
      %c0_50 = arith.constant 0 : index
      %139 = vector.load %arg10[%c0_49, %c0_50] : memref<8x128xf32, #tpu.memory_space<vmem>>, vector<8x128xf32>
      tpu.vector_store %arg10[%c0_49, %c0_50], %138 {strides = array<i32>} : memref<8x128xf32, #tpu.memory_space<vmem>>, vector<8x128xf32>,
    } else {
    }
    %c0 = arith.constant 0 : index
    %c0_1 = arith.constant 0 : index
    %3 = vector.load %arg10[%c0, %c0_1] : memref<8x128xf32, #tpu.memory_space<vmem>>, vector<8x128xf32>
    %c0_2 = arith.constant 0 : index
    %c0_3 = arith.constant 0 : index
    %c0_4 = arith.constant 0 : index
    %4 = vector.load %arg8[%c0_2, %c0_3, %c0_4] : memref<1x8x512xf32, #tpu.memory_space<vmem>>, vector<1x8x512xf32>
    %5 = vector.shape_cast %4 : vector<1x8x512xf32> to vector<8x512xf32>
    %6 = vector.extract_strided_slice %5 {offsets = [0, 0], sizes = [1, 384], strides = [1, 1]} : vector<8x512xf32> to vector<1x384xf32>
    %7 = vector.extract_strided_slice %5 {offsets = [1, 0], sizes = [1, 128], strides = [1, 1]} : vector<8x512xf32> to vector<1x128xf32>
    %8 = vector.extract_strided_slice %5 {offsets = [2, 0], sizes = [1, 128], strides = [1, 1]} : vector<8x512xf32> to vector<1x128xf32>
    %9 = vector.extract_strided_slice %5 {offsets = [3, 0], sizes = [1, 128], strides = [1, 1]} : vector<8x512xf32> to vector<1x128xf32>
    %10 = vector.extract_strided_slice %5 {offsets = [4, 0], sizes = [1, 512], strides = [1, 1]} : vector<8x512xf32> to vector<1x512xf32>
    %11 = vector.extract_strided_slice %5 {offsets = [5, 0], sizes = [1, 128], strides = [1, 1]} : vector<8x512xf32> to vector<1x128xf32>
    %12 = vector.extract_strided_slice %5 {offsets = [6, 0], sizes = [1, 128], strides = [1, 1]} : vector<8x512xf32> to vector<1x128xf32>
    %13 = vector.extract_strided_slice %5 {offsets = [7, 0], sizes = [1, 128], strides = [1, 1]} : vector<8x512xf32> to vector<1x128xf32>
    %c0_5 = arith.constant 0 : index
    %c0_6 = arith.constant 0 : index
    %c0_7 = arith.constant 0 : index
    %14 = vector.load %arg4[%c0_5, %c0_6, %c0_7] : memref<1x128x384xbf16, #tpu.memory_space<vmem>>, vector<1x128x384xbf16>
    %15 = vector.shape_cast %14 : vector<1x128x384xbf16> to vector<128x384xbf16>
    %c0_8 = arith.constant 0 : index
    %c0_9 = arith.constant 0 : index
    %c0_10 = arith.constant 0 : index
    %16 = vector.load %arg5[%c0_8, %c0_9, %c0_10] : memref<1x128x128xbf16, #tpu.memory_space<vmem>>, vector<1x128x128xbf16>
    %17 = vector.shape_cast %16 : vector<1x128x128xbf16> to vector<128x128xbf16>
    %c0_11 = arith.constant 0 : index
    %c0_12 = arith.constant 0 : index
    %c0_13 = arith.constant 0 : index
    %18 = vector.load %arg6[%c0_11, %c0_12, %c0_13] : memref<1x128x512xbf16, #tpu.memory_space<vmem>>, vector<1x128x512xbf16>
    %19 = vector.shape_cast %18 : vector<1x128x512xbf16> to vector<128x512xbf16>
    %c0_14 = arith.constant 0 : index
    %c0_15 = arith.constant 0 : index
    %c0_16 = arith.constant 0 : index
    %20 = vector.load %arg7[%c0_14, %c0_15, %c0_16] : memref<1x512x128xbf16, #tpu.memory_space<vmem>>, vector<1x512x128xbf16>
    %21 = vector.shape_cast %20 : vector<1x512x128xbf16> to vector<512x128xbf16>
    %c0_17 = arith.constant 0 : index
    %c0_18 = arith.constant 0 : index
    %c0_19 = arith.constant 0 : index
    %22 = vector.load %arg3[%c0_17, %c0_18, %c0_19] : memref<1x1x8xf32, #tpu.memory_space<vmem>>, vector<1x1x8xf32>
    %23 = vector.shape_cast %22 : vector<1x1x8xf32> to vector<1x8xf32>
    %cst = arith.constant 1.000000e+00 : f32
    %24 = vector.broadcast %cst : f32 to vector<1x8xf32>
    %25 = arith.subf %23, %24 : vector<1x8xf32>
    %cst_20 = arith.constant 1.000000e+09 : f32
    %26 = vector.broadcast %cst_20 : f32 to vector<1x8xf32>
    %27 = arith.mulf %25, %26 : vector<1x8xf32>
    %28 = arith.truncf %3 : vector<8x128xf32> to vector<8x128xbf16>
    %cst_21 = arith.constant dense<0.000000e+00> : vector<8x384xf32>
    %29 = tpu.matmul %28, %15, %cst_21 {dimension_numbers = #tpu.dot_dimension_numbers<[1], [0], [0], [1], [0, 0, 1, 1], [], []>} : vector<8x128xbf16>, vector<128x384xbf16>, vector<8x384xf32> -> vector<8x384xf32>
    %30 = vector.broadcast %6 : vector<1x384xf32> to vector<8x384xf32>
    %31 = arith.addf %29, %30 : vector<8x384xf32>
    %32 = vector.extract_strided_slice %31 {offsets = [0, 0], sizes = [8, 128], strides = [1, 1]} : vector<8x384xf32> to vector<8x128xf32>
    %33 = vector.shape_cast %32 : vector<8x128xf32> to vector<8x2x64xf32>
    %34 = tpu.transpose %33, [1, 0, 2] : vector<8x2x64xf32> -> vector<2x8x64xf32>
    %35 = vector.extract_strided_slice %31 {offsets = [0, 128], sizes = [8, 128], strides = [1, 1]} : vector<8x384xf32> to vector<8x128xf32>
    %36 = vector.shape_cast %35 : vector<8x128xf32> to vector<8x2x64xf32>
    %37 = tpu.transpose %36, [1, 0, 2] : vector<8x2x64xf32> -> vector<2x8x64xf32>
    %38 = vector.extract_strided_slice %31 {offsets = [0, 256], sizes = [8, 128], strides = [1, 1]} : vector<8x384xf32> to vector<8x128xf32>
    %39 = vector.shape_cast %38 : vector<8x128xf32> to vector<8x2x64xf32>
    %40 = tpu.transpose %39, [1, 0, 2] : vector<8x2x64xf32> -> vector<2x8x64xf32>
    %41 = arith.truncf %34 : vector<2x8x64xf32> to vector<2x8x64xbf16>
    %42 = arith.truncf %37 : vector<2x8x64xf32> to vector<2x8x64xbf16>
    "tpu.trace_start"() <{level = 10 : i32, message = "hqd,hkd->hqk"}> : () -> ()
    %cst_22 = arith.constant dense<0.000000e+00> : vector<2x8x8xf32>
    %43 = tpu.matmul %41, %42, %cst_22 {dimension_numbers = #tpu.dot_dimension_numbers<[2], [2], [1], [1], [0, 0, 0, 1, 1, 1], [0], [0]>} : vector<2x8x64xbf16>, vector<2x8x64xbf16>, vector<2x8x8xf32> -> vector<2x8x8xf32>
    "tpu.trace_stop"() : () -> ()
    %44 = vector.shape_cast %27 : vector<1x8xf32> to vector<1x1x8xf32>
    %45 = vector.broadcast %44 : vector<1x1x8xf32> to vector<2x8x8xf32>
    %46 = arith.addf %43, %45 : vector<2x8x8xf32>
    %cst_23 = arith.constant dense<0xFF800000> : vector<2x8xf32>
    %47 = vector.multi_reduction <maximumf>, %46, %cst_23 [2] : vector<2x8x8xf32> to vector<2x8xf32>
    %48 = vector.shape_cast %47 : vector<2x8xf32> to vector<2x8x1xf32>
    %49 = vector.broadcast %48 : vector<2x8x1xf32> to vector<2x8x8xf32>
    %50 = arith.subf %46, %49 : vector<2x8x8xf32>
    %51 = math.exp %50 : vector<2x8x8xf32>
    %cst_24 = arith.constant dense<0.000000e+00> : vector<2x8xf32>
    %52 = vector.multi_reduction <add>, %51, %cst_24 [2] : vector<2x8x8xf32> to vector<2x8xf32>
    %53 = vector.shape_cast %52 : vector<2x8xf32> to vector<2x8x1xf32>
    %54 = arith.truncf %51 : vector<2x8x8xf32> to vector<2x8x8xbf16>
    %55 = arith.truncf %40 : vector<2x8x64xf32> to vector<2x8x64xbf16>
    "tpu.trace_start"() <{level = 10 : i32, message = "hqk,hkd->hqd"}> : () -> ()
    %cst_25 = arith.constant dense<0.000000e+00> : vector<2x8x64xf32>
    %56 = tpu.matmul %54, %55, %cst_25 {dimension_numbers = #tpu.dot_dimension_numbers<[2], [1], [1], [2], [0, 0, 0, 1, 1, 2], [0], [0]>} : vector<2x8x8xbf16>, vector<2x8x64xbf16>, vector<2x8x64xf32> -> vector<2x8x64xf32>
    "tpu.trace_stop"() : () -> ()
    %57 = tpu.reciprocal %53 {approx = true} : vector<2x8x1xf32> -> vector<2x8x1xf32>
    %58 = vector.broadcast %57 : vector<2x8x1xf32> to vector<2x8x64xf32>
    %59 = arith.mulf %56, %58 : vector<2x8x64xf32>
    %60 = tpu.transpose %59, [1, 0, 2] : vector<2x8x64xf32> -> vector<8x2x64xf32>
    %61 = vector.shape_cast %60 : vector<8x2x64xf32> to vector<8x128xf32>
    %62 = arith.truncf %61 : vector<8x128xf32> to vector<8x128xbf16>
    %cst_26 = arith.constant dense<0.000000e+00> : vector<8x128xf32>
    %63 = tpu.matmul %62, %17, %cst_26 {dimension_numbers = #tpu.dot_dimension_numbers<[1], [0], [0], [1], [0, 0, 1, 1], [], []>} : vector<8x128xbf16>, vector<128x128xbf16>, vector<8x128xf32> -> vector<8x128xf32>
    %64 = vector.broadcast %7 : vector<1x128xf32> to vector<8x128xf32>
    %65 = arith.addf %63, %64 : vector<8x128xf32>
    %66 = arith.addf %3, %65 : vector<8x128xf32>
    %cst_27 = arith.constant dense<0.000000e+00> : vector<8xf32>
    %67 = vector.multi_reduction <add>, %66, %cst_27 [1] : vector<8x128xf32> to vector<8xf32>
    %68 = vector.shape_cast %67 : vector<8xf32> to vector<8x1xf32>
    %cst_28 = arith.constant 1.280000e+02 : f32
    %69 = vector.broadcast %cst_28 : f32 to vector<8x1xf32>
    %70 = arith.divf %68, %69 : vector<8x1xf32>
    %71 = vector.broadcast %70 : vector<8x1xf32> to vector<8x128xf32>
    %72 = arith.subf %66, %71 : vector<8x128xf32>
    %73 = arith.mulf %72, %72 : vector<8x128xf32>
    %cst_29 = arith.constant dense<0.000000e+00> : vector<8xf32>
    %74 = vector.multi_reduction <add>, %73, %cst_29 [1] : vector<8x128xf32> to vector<8xf32>
    %75 = vector.shape_cast %74 : vector<8xf32> to vector<8x1xf32>
    %cst_30 = arith.constant 1.280000e+02 : f32
    %76 = vector.broadcast %cst_30 : f32 to vector<8x1xf32>
    %77 = arith.divf %75, %76 : vector<8x1xf32>
    %78 = vector.broadcast %70 : vector<8x1xf32> to vector<8x128xf32>
    %79 = arith.subf %66, %78 : vector<8x128xf32>
    %cst_31 = arith.constant 9.99999996E-13 : f32
    %80 = vector.broadcast %cst_31 : f32 to vector<8x1xf32>
    %81 = arith.addf %77, %80 : vector<8x1xf32>
    %82 = math.rsqrt %81 : vector<8x1xf32>
    %83 = vector.broadcast %82 : vector<8x1xf32> to vector<8x128xf32>
    %84 = arith.mulf %79, %83 : vector<8x128xf32>
    %85 = vector.broadcast %8 : vector<1x128xf32> to vector<8x128xf32>
    %86 = arith.mulf %84, %85 : vector<8x128xf32>
    %87 = vector.broadcast %9 : vector<1x128xf32> to vector<8x128xf32>
    %88 = arith.addf %86, %87 : vector<8x128xf32>
    %89 = arith.truncf %88 : vector<8x128xf32> to vector<8x128xbf16>
    %cst_32 = arith.constant dense<0.000000e+00> : vector<8x512xf32>
    %90 = tpu.matmul %89, %19, %cst_32 {dimension_numbers = #tpu.dot_dimension_numbers<[1], [0], [0], [1], [0, 0, 1, 1], [], []>} : vector<8x128xbf16>, vector<128x512xbf16>, vector<8x512xf32> -> vector<8x512xf32>
    %91 = vector.broadcast %10 : vector<1x512xf32> to vector<8x512xf32>
    %92 = arith.addf %90, %91 : vector<8x512xf32>
    %cst_33 = arith.constant 5.000000e-01 : f32
    %93 = vector.broadcast %cst_33 : f32 to vector<8x512xf32>
    %94 = arith.mulf %93, %92 : vector<8x512xf32>
    %cst_34 = arith.constant 4.471500e-02 : f32
    %95 = vector.broadcast %cst_34 : f32 to vector<8x512xf32>
    %96 = arith.mulf %95, %92 : vector<8x512xf32>
    %97 = arith.mulf %96, %92 : vector<8x512xf32>
    %98 = arith.mulf %97, %92 : vector<8x512xf32>
    %99 = arith.addf %92, %98 : vector<8x512xf32>
    %cst_35 = arith.constant 0.797884583 : f32
    %100 = vector.broadcast %cst_35 : f32 to vector<8x512xf32>
    %101 = arith.mulf %100, %99 : vector<8x512xf32>
    %102 = math.tanh %101 : vector<8x512xf32>
    %cst_36 = arith.constant 1.000000e+00 : f32
    %103 = vector.broadcast %cst_36 : f32 to vector<8x512xf32>
    %104 = arith.addf %103, %102 : vector<8x512xf32>
    %105 = arith.mulf %94, %104 : vector<8x512xf32>
    %106 = arith.truncf %105 : vector<8x512xf32> to vector<8x512xbf16>
    %cst_37 = arith.constant dense<0.000000e+00> : vector<8x128xf32>
    %107 = tpu.matmul %106, %21, %cst_37 {dimension_numbers = #tpu.dot_dimension_numbers<[1], [0], [0], [1], [0, 0, 1, 1], [], []>} : vector<8x512xbf16>, vector<512x128xbf16>, vector<8x128xf32> -> vector<8x128xf32>
    %108 = vector.broadcast %11 : vector<1x128xf32> to vector<8x128xf32>
    %109 = arith.addf %107, %108 : vector<8x128xf32>
    %110 = arith.addf %88, %109 : vector<8x128xf32>
    %cst_38 = arith.constant dense<0.000000e+00> : vector<8xf32>
    %111 = vector.multi_reduction <add>, %110, %cst_38 [1] : vector<8x128xf32> to vector<8xf32>
    %112 = vector.shape_cast %111 : vector<8xf32> to vector<8x1xf32>
    %cst_39 = arith.constant 1.280000e+02 : f32
    %113 = vector.broadcast %cst_39 : f32 to vector<8x1xf32>
    %114 = arith.divf %112, %113 : vector<8x1xf32>
    %115 = vector.broadcast %114 : vector<8x1xf32> to vector<8x128xf32>
    %116 = arith.subf %110, %115 : vector<8x128xf32>
    %117 = arith.mulf %116, %116 : vector<8x128xf32>
    %cst_40 = arith.constant dense<0.000000e+00> : vector<8xf32>
    %118 = vector.multi_reduction <add>, %117, %cst_40 [1] : vector<8x128xf32> to vector<8xf32>
    %119 = vector.shape_cast %118 : vector<8xf32> to vector<8x1xf32>
    %cst_41 = arith.constant 1.280000e+02 : f32
    %120 = vector.broadcast %cst_41 : f32 to vector<8x1xf32>
    %121 = arith.divf %119, %120 : vector<8x1xf32>
    %122 = vector.broadcast %114 : vector<8x1xf32> to vector<8x128xf32>
    %123 = arith.subf %110, %122 : vector<8x128xf32>
    %cst_42 = arith.constant 9.99999996E-13 : f32
    %124 = vector.broadcast %cst_42 : f32 to vector<8x1xf32>
    %125 = arith.addf %121, %124 : vector<8x1xf32>
    %126 = math.rsqrt %125 : vector<8x1xf32>
    %127 = vector.broadcast %126 : vector<8x1xf32> to vector<8x128xf32>
    %128 = arith.mulf %123, %127 : vector<8x128xf32>
    %129 = vector.broadcast %12 : vector<1x128xf32> to vector<8x128xf32>
    %130 = arith.mulf %128, %129 : vector<8x128xf32>
    %131 = vector.broadcast %13 : vector<1x128xf32> to vector<8x128xf32>
    %132 = arith.addf %130, %131 : vector<8x128xf32>
    %c0_43 = arith.constant 0 : index
    %c0_44 = arith.constant 0 : index
    %133 = vector.load %arg10[%c0_43, %c0_44] : memref<8x128xf32, #tpu.memory_space<vmem>>, vector<8x128xf32>
    tpu.vector_store %arg10[%c0_43, %c0_44], %132 {strides = array<i32>} : memref<8x128xf32, #tpu.memory_space<vmem>>, vector<8x128xf32>,
    %c1_i32 = arith.constant 1 : i32
    %134 = arith.cmpi eq, %arg1, %c1_i32 : i32
    %135 = arith.extui %134 : i1 to i32
    %c0_i32_45 = arith.constant 0 : i32
    %136 = arith.cmpi ne, %135, %c0_i32_45 : i32
    scf.if %136 {
      %137 = vector.extract_strided_slice %132 {offsets = [0, 0], sizes = [1, 128], strides = [1, 1]} : vector<8x128xf32> to vector<1x128xf32>
      %c0_46 = arith.constant 0 : index
      %c0_47 = arith.constant 0 : index
      %c0_48 = arith.constant 0 : index
      %138 = vector.load %arg9[%c0_46, %c0_47, %c0_48] : memref<1x1x128xf32, #tpu.memory_space<vmem>>, vector<1x1x128xf32>
      %139 = vector.shape_cast %138 : vector<1x1x128xf32> to vector<1x128xf32>
      %140 = vector.shape_cast %137 : vector<1x128xf32> to vector<1x1x128xf32>
      tpu.vector_store %arg9[%c0_46, %c0_47, %c0_48], %140 {strides = array<i32>} : memref<1x1x128xf32, #tpu.memory_space<vmem>>, vector<1x1x128xf32>,
    } else {
    }
    return
  }
  func.func @transform_0(%arg0: i32, %arg1: i32) -> (i32, i32, i32) {
    %c0_i32 = arith.constant 0 : i32
    %c0_i32_0 = arith.constant 0 : i32
    %c0_i32_1 = arith.constant 0 : i32
    return %arg0, %c0_i32, %c0_i32_0 : i32, i32, i32
  }
  func.func @transform_1(%arg0: i32, %arg1: i32) -> (i32, i32, i32) {
    %c0_i32 = arith.constant 0 : i32
    %c0_i32_0 = arith.constant 0 : i32
    %c0_i32_1 = arith.constant 0 : i32
    return %arg0, %c0_i32, %c0_i32_0 : i32, i32, i32
  }
  func.func @transform_2(%arg0: i32, %arg1: i32) -> (i32, i32, i32) {
    %c0_i32 = arith.constant 0 : i32
    %c0_i32_0 = arith.constant 0 : i32
    %c0_i32_1 = arith.constant 0 : i32
    return %arg1, %c0_i32, %c0_i32_0 : i32, i32, i32
  }
  func.func @transform_3(%arg0: i32, %arg1: i32) -> (i32, i32, i32) {
    %c0_i32 = arith.constant 0 : i32
    %c0_i32_0 = arith.constant 0 : i32
    %c0_i32_1 = arith.constant 0 : i32
    return %arg1, %c0_i32, %c0_i32_0 : i32, i32, i32
  }
  func.func @transform_4(%arg0: i32, %arg1: i32) -> (i32, i32, i32) {
    %c0_i32 = arith.constant 0 : i32
    %c0_i32_0 = arith.constant 0 : i32
    %c0_i32_1 = arith.constant 0 : i32
    return %arg1, %c0_i32, %c0_i32_0 : i32, i32, i32
  }
  func.func @transform_5(%arg0: i32, %arg1: i32) -> (i32, i32, i32) {
    %c0_i32 = arith.constant 0 : i32
    %c0_i32_0 = arith.constant 0 : i32
    %c0_i32_1 = arith.constant 0 : i32
    return %arg1, %c0_i32, %c0_i32_0 : i32, i32, i32
  }
  func.func @transform_6(%arg0: i32, %arg1: i32) -> (i32, i32, i32) {
    %c0_i32 = arith.constant 0 : i32
    %c0_i32_0 = arith.constant 0 : i32
    %c0_i32_1 = arith.constant 0 : i32
    return %arg1, %c0_i32, %c0_i32_0 : i32, i32, i32
  }
  func.func @transform_7(%arg0: i32, %arg1: i32) -> (i32, i32, i32) {
    %c0_i32 = arith.constant 0 : i32
    %c0_i32_0 = arith.constant 0 : i32
    %c0_i32_1 = arith.constant 0 : i32
    return %arg0, %c0_i32, %c0_i32_0 : i32, i32, i32
  }
}

</mosaic_0001>

<llo_original>
// kernel: tpu_custom_call.1
$region0: #{tpu_custom_call.1}
  #allocation0 [shape = 'u32[]', space=smem, size = 0x4, offset = 0x4, fixed_abs, tag = 'smem constant byte address 0x4 - core index']
  #allocation1 [shape = 'u32[144,128]{1,0:T(1,128)}', space=vmem, size = 0x12000, scoped, tag = 'internal scratch']
  #allocation2 [shape = 'f32[8,128]{1,0:T(8,128)}', space=vmem, size = 0x1000, scoped, tag = 'scratch operand']
  %s0 = inlined_call_operand.hbm [shape: f32[2,8,128], index: 0, kind: input, shape index: {}]
  %s1 = inlined_call_operand.hbm [shape: f32[2,1,8], index: 1, kind: input, shape index: {}]
  %s2 = inlined_call_operand.hbm [shape: bf16[2,128,384], index: 2, kind: input, shape index: {}]
  %s3 = inlined_call_operand.hbm [shape: bf16[2,128,128], index: 3, kind: input, shape index: {}]
  %s4 = inlined_call_operand.hbm [shape: bf16[2,128,512], index: 4, kind: input, shape index: {}]
  %s5 = inlined_call_operand.hbm [shape: bf16[2,512,128], index: 5, kind: input, shape index: {}]
  %s6 = inlined_call_operand.hbm [shape: f32[2,8,512], index: 6, kind: input, shape index: {}]
  %s7 = inlined_call_operand.hbm [shape: f32[2,1,128], index: 7, kind: output, shape index: {}]
  %s8 = sld [smem:[#allocation0]]
  $region97: #{tpu_custom_call.1} parent=0
    _
  %s10 = ssub.s32 1, %s8
  %s11 = scalar_select 0, %s10, %s8
  $region1: #{tpu_custom_call.1} parent=0
    #allocation3 [shape = 'u8[8192]{0}', space=vmem, size = 0x2000, scoped, tag = 'input window, operand 0']
    #allocation4 [shape = 's32[2]{0}', space=sflag, size = 0x8, scoped, tag = 'scoped memory for tpu_custom_call.1']
    #allocation5 [shape = 's32[2]{0}', space=sflag, size = 0x8, scoped, tag = 'scoped memory for tpu_custom_call.1']
    #allocation6 [shape = 'u8[1024]{0}', space=vmem, size = 0x400, scoped, tag = 'input window, operand 1']
    #allocation7 [shape = 's32[2]{0}', space=sflag, size = 0x8, scoped, tag = 'scoped memory for tpu_custom_call.1']
    #allocation8 [shape = 'u8[196608]{0}', space=vmem, size = 0x30000, scoped, tag = 'input window, operand 2']
    #allocation9 [shape = 'u8[65536]{0}', space=vmem, size = 0x10000, scoped, tag = 'input window, operand 3']
    #allocation10 [shape = 's32[2]{0}', space=sflag, size = 0x8, scoped, tag = 'scoped memory for tpu_custom_call.1']
    #allocation11 [shape = 'u8[262144]{0}', space=vmem, size = 0x40000, scoped, tag = 'input window, operand 4']
    #allocation12 [shape = 'u8[262144]{0}', space=vmem, size = 0x40000, scoped, tag = 'input window, operand 5']
    #allocation13 [shape = 's32[2]{0}', space=sflag, size = 0x8, scoped, tag = 'scoped memory for tpu_custom_call.1']
    #allocation14 [shape = 'u8[32768]{0}', space=vmem, size = 0x8000, scoped, tag = 'input window, operand 6']
    #allocation15 [shape = 'u8[1024]{0}', space=vmem, size = 0x400, scoped, tag = 'output window, operand 0']
    %12 = vsyncpa [#allocation4], 0
    %s13 = scalar_lea.sflag [#allocation4], 1
    %14 = vsyncpa %s13, 0
    %15 = vsyncpa [#allocation7], 0
    %s16 = scalar_lea.sflag [#allocation7], 1
    %17 = vsyncpa %s16, 0
    %18 = vsyncpa [#allocation10], 0
    %s19 = scalar_lea.sflag [#allocation10], 1
    %20 = vsyncpa %s19, 0
    %21 = vsyncpa [#allocation13], 0
    %s22 = scalar_lea.sflag [#allocation13], 1
    %23 = vsyncpa %s22, 0
    %24 = vsyncpa [#allocation5], 0
    %s25 = scalar_lea.sflag [#allocation5], 1
    %26 = vsyncpa %s25, 0
    loop: start=0, step=1, limit=6
    $region2: #{tpu_custom_call.1} parent=1 // loop_pre_header
      _
    $region3: #{tpu_custom_call.1} parent=1 // loop_header
      %s28 = sphi 0, %s32
      %p29 = scmp.ge.s32.totalorder %s28, 6
      %s35 = sphi 0, %s47
      %s36 = sphi 0, %s43
      %s37 = sphi 0, %s35
      %s38 = sphi 0, %s36
      %s39 = sphi 0, %s37
      %s40 = sphi 0, %s38
      %s50 = sphi 0, %s52
      %s53 = sphi 0, %s50
      %s54 = sphi 0, %s53
      %s70 = sphi 0, %s54
      %s76 = sphi 0, %s78
      %s79 = sphi 0, %s76
      %s80 = sphi 0, %s79
      %s96 = sphi 0, %s80
      %s102 = sphi 0, %s104
      %s105 = sphi 0, %s102
      %s106 = sphi 0, %s105
      %s122 = sphi 0, %s106
      %s128 = sphi 0, %s130
      %s131 = sphi 0, %s128
      %s132 = sphi 0, %s131
      %s148 = sphi 0, %s132
      %s154 = sphi 0, %s156
      %s157 = sphi 0, %s154
      %s158 = sphi 0, %s157
      %s174 = sphi 0, %s158
      %s180 = sphi 0, %s182
      %s183 = sphi 0, %s180
      %s184 = sphi 0, %s183
      %s200 = sphi 0, %s184
      %s206 = sphi 0, %s208
      %s209 = sphi 0, %s206
      %s210 = sphi 0, %s209
      %s226 = sphi 0, %s210
      %s232 = sphi 0, %s234
      %s235 = sphi 0, %s232
      %s236 = sphi 0, %s235
      %s252 = sphi 0, %s236
    $region4: #{tpu_custom_call.1} parent=1 // loop_header_branch
      %31 = sbr.rel (%p29) target = $region8
    $region5: #{tpu_custom_call.1} parent=1 // loop_body
      %s33 = ssub.s32 %s28, 1
      %s34 = ssub.s32 %s28, 2
      %s41 = sadd.s32 1, %s36
      %p42 = scmp.ge.s32.totalorder %s41, 2
      %s43 = scalar_select %p42, 0, %s41
      %s44 = sadd.s32 1, %s35
      %s45 = scalar_select %p42, %s44, %s35
      %p46 = scmp.ge.s32.totalorder %s45, 2
      %s47 = scalar_select %p46, 0, %s45
      %s48 = ssub.s32 %s35, %s47
      %p49 = scmp.eq.s32.totalorder %s48, 0
      %s51 = sadd.s32 %s50, 1
      %s52 = scalar_select %p49, %s50, %s51
      %p55 = pneg %p49
      %p56 = scmp.eq.s32.totalorder %s28, 3
      %p57 = por %p55, %p56
      %p58 = scmp.ne.s32.totalorder %s50, %s53
      %p59 = scmp.eq.s32.totalorder %s28, 0
      %p60 = por %p58, %p59
      %p61 = scmp.ne.s32.totalorder %s50, %s53
      %p62 = scmp.eq.s32.totalorder %s33, 3
      %p63 = por %p61, %p62
      %p64 = scmp.ne.s32.totalorder %s53, %s54
      %p65 = scmp.eq.s32.totalorder %s33, 0
      %p66 = por %p64, %p65
      %p67 = scmp.ne.s32.totalorder %s53, %s54
      %p68 = scmp.eq.s32.totalorder %s34, 3
      %p69 = por %p67, %p68
      %p71 = scmp.ne.s32.totalorder %s54, %s70
      %p72 = scmp.eq.s32.totalorder %s34, 0
      %p73 = por %p71, %p72
      %s74 = ssub.s32 %s35, %s47
      %p75 = scmp.eq.s32.totalorder %s74, 0
      %s77 = sadd.s32 %s76, 1
      %s78 = scalar_select %p75, %s76, %s77
      %p81 = pneg %p75
      %p82 = scmp.eq.s32.totalorder %s28, 3
      %p83 = por %p81, %p82
      %p84 = scmp.ne.s32.totalorder %s76, %s79
      %p85 = scmp.eq.s32.totalorder %s28, 0
      %p86 = por %p84, %p85
      %p87 = scmp.ne.s32.totalorder %s76, %s79
      %p88 = scmp.eq.s32.totalorder %s33, 3
      %p89 = por %p87, %p88
      %p90 = scmp.ne.s32.totalorder %s79, %s80
      %p91 = scmp.eq.s32.totalorder %s33, 0
      %p92 = por %p90, %p91
      %p93 = scmp.ne.s32.totalorder %s79, %s80
      %p94 = scmp.eq.s32.totalorder %s34, 3
      %p95 = por %p93, %p94
      %p97 = scmp.ne.s32.totalorder %s80, %s96
      %p98 = scmp.eq.s32.totalorder %s34, 0
      %p99 = por %p97, %p98
      %s100 = ssub.s32 %s36, %s43
      %p101 = scmp.eq.s32.totalorder %s100, 0
      %s103 = sadd.s32 %s102, 1
      %s104 = scalar_select %p101, %s102, %s103
      %p107 = pneg %p101
      %p108 = scmp.eq.s32.totalorder %s28, 3
      %p109 = por %p107, %p108
      %p110 = scmp.ne.s32.totalorder %s102, %s105
      %p111 = scmp.eq.s32.totalorder %s28, 0
      %p112 = por %p110, %p111
      %p113 = scmp.ne.s32.totalorder %s102, %s105
      %p114 = scmp.eq.s32.totalorder %s33, 3
      %p115 = por %p113, %p114
      %p116 = scmp.ne.s32.totalorder %s105, %s106
      %p117 = scmp.eq.s32.totalorder %s33, 0
      %p118 = por %p116, %p117
      %p119 = scmp.ne.s32.totalorder %s105, %s106
      %p120 = scmp.eq.s32.totalorder %s34, 3
      %p121 = por %p119, %p120
      %p123 = scmp.ne.s32.totalorder %s106, %s122
      %p124 = scmp.eq.s32.totalorder %s34, 0
      %p125 = por %p123, %p124
      %s126 = ssub.s32 %s36, %s43
      %p127 = scmp.eq.s32.totalorder %s126, 0
      %s129 = sadd.s32 %s128, 1
      %s130 = scalar_select %p127, %s128, %s129
      %p133 = pneg %p127
      %p134 = scmp.eq.s32.totalorder %s28, 3
      %p135 = por %p133, %p134
      %p136 = scmp.ne.s32.totalorder %s128, %s131
      %p137 = scmp.eq.s32.totalorder %s28, 0
      %p138 = por %p136, %p137
      %p139 = scmp.ne.s32.totalorder %s128, %s131
      %p140 = scmp.eq.s32.totalorder %s33, 3
      %p141 = por %p139, %p140
      %p142 = scmp.ne.s32.totalorder %s131, %s132
      %p143 = scmp.eq.s32.totalorder %s33, 0
      %p144 = por %p142, %p143
      %p145 = scmp.ne.s32.totalorder %s131, %s132
      %p146 = scmp.eq.s32.totalorder %s34, 3
      %p147 = por %p145, %p146
      %p149 = scmp.ne.s32.totalorder %s132, %s148
      %p150 = scmp.eq.s32.totalorder %s34, 0
      %p151 = por %p149, %p150
      %s152 = ssub.s32 %s36, %s43
      %p153 = scmp.eq.s32.totalorder %s152, 0
      %s155 = sadd.s32 %s154, 1
      %s156 = scalar_select %p153, %s154, %s155
      %p159 = pneg %p153
      %p160 = scmp.eq.s32.totalorder %s28, 3
      %p161 = por %p159, %p160
      %p162 = scmp.ne.s32.totalorder %s154, %s157
      %p163 = scmp.eq.s32.totalorder %s28, 0
      %p164 = por %p162, %p163
      %p165 = scmp.ne.s32.totalorder %s154, %s157
      %p166 = scmp.eq.s32.totalorder %s33, 3
      %p167 = por %p165, %p166
      %p168 = scmp.ne.s32.totalorder %s157, %s158
      %p169 = scmp.eq.s32.totalorder %s33, 0
      %p170 = por %p168, %p169
      %p171 = scmp.ne.s32.totalorder %s157, %s158
      %p172 = scmp.eq.s32.totalorder %s34, 3
      %p173 = por %p171, %p172
      %p175 = scmp.ne.s32.totalorder %s158, %s174
      %p176 = scmp.eq.s32.totalorder %s34, 0
      %p177 = por %p175, %p176
      %s178 = ssub.s32 %s36, %s43
      %p179 = scmp.eq.s32.totalorder %s178, 0
      %s181 = sadd.s32 %s180, 1
      %s182 = scalar_select %p179, %s180, %s181
      %p185 = pneg %p179
      %p186 = scmp.eq.s32.totalorder %s28, 3
      %p187 = por %p185, %p186
      %p188 = scmp.ne.s32.totalorder %s180, %s183
      %p189 = scmp.eq.s32.totalorder %s28, 0
      %p190 = por %p188, %p189
      %p191 = scmp.ne.s32.totalorder %s180, %s183
      %p192 = scmp.eq.s32.totalorder %s33, 3
      %p193 = por %p191, %p192
      %p194 = scmp.ne.s32.totalorder %s183, %s184
      %p195 = scmp.eq.s32.totalorder %s33, 0
      %p196 = por %p194, %p195
      %p197 = scmp.ne.s32.totalorder %s183, %s184
      %p198 = scmp.eq.s32.totalorder %s34, 3
      %p199 = por %p197, %p198
      %p201 = scmp.ne.s32.totalorder %s184, %s200
      %p202 = scmp.eq.s32.totalorder %s34, 0
      %p203 = por %p201, %p202
      %s204 = ssub.s32 %s36, %s43
      %p205 = scmp.eq.s32.totalorder %s204, 0
      %s207 = sadd.s32 %s206, 1
      %s208 = scalar_select %p205, %s206, %s207
      %p211 = pneg %p205
      %p212 = scmp.eq.s32.totalorder %s28, 3
      %p213 = por %p211, %p212
      %p214 = scmp.ne.s32.totalorder %s206, %s209
      %p215 = scmp.eq.s32.totalorder %s28, 0
      %p216 = por %p214, %p215
      %p217 = scmp.ne.s32.totalorder %s206, %s209
      %p218 = scmp.eq.s32.totalorder %s33, 3
      %p219 = por %p217, %p218
      %p220 = scmp.ne.s32.totalorder %s209, %s210
      %p221 = scmp.eq.s32.totalorder %s33, 0
      %p222 = por %p220, %p221
      %p223 = scmp.ne.s32.totalorder %s209, %s210
      %p224 = scmp.eq.s32.totalorder %s34, 3
      %p225 = por %p223, %p224
      %p227 = scmp.ne.s32.totalorder %s210, %s226
      %p228 = scmp.eq.s32.totalorder %s34, 0
      %p229 = por %p227, %p228
      %s230 = ssub.s32 %s35, %s47
      %p231 = scmp.eq.s32.totalorder %s230, 0
      %s233 = sadd.s32 %s232, 1
      %s234 = scalar_select %p231, %s232, %s233
      %p237 = pneg %p231
      %p238 = scmp.eq.s32.totalorder %s28, 3
      %p239 = por %p237, %p238
      %p240 = scmp.ne.s32.totalorder %s232, %s235
      %p241 = scmp.eq.s32.totalorder %s28, 0
      %p242 = por %p240, %p241
      %p243 = scmp.ne.s32.totalorder %s232, %s235
      %p244 = scmp.eq.s32.totalorder %s33, 3
      %p245 = por %p243, %p244
      %p246 = scmp.ne.s32.totalorder %s235, %s236
      %p247 = scmp.eq.s32.totalorder %s33, 0
      %p248 = por %p246, %p247
      %p249 = scmp.ne.s32.totalorder %s235, %s236
      %p250 = scmp.eq.s32.totalorder %s34, 3
      %p251 = por %p249, %p250
      %p253 = scmp.ne.s32.totalorder %s236, %s252
      %p254 = scmp.eq.s32.totalorder %s34, 0
      %p255 = por %p253, %p254
      %p256 = scmp.le.s32.totalorder 1, %s28
      %p257 = scmp.lt.s32.totalorder %s28, 5
      %p258 = pnand %p256, %p257
      %p259 = pneg %p258
      // Predicated region
      $region9: #{tpu_custom_call.1} parent=5 // pred_check
        _
      $region10: #{tpu_custom_call.1} parent=5 // pred_check_branch
        %261 = sbr.rel (%p258) target = $region12
      $region11: #{tpu_custom_call.1} parent=5 // pred_region
        %s262 = ssub.s32 %s28, 1
      $region12: #{tpu_custom_call.1} parent=5 // pred_fallthru
        _
      %p263 = scmp.lt.s32.totalorder %s28, 4
      // Predicated region
      $region13: #{tpu_custom_call.1} parent=5 // pred_check
        %p264 = pneg %p263
      $region14: #{tpu_custom_call.1} parent=5 // pred_check_branch
        %266 = sbr.rel (%p264) target = $region16
      $region15: #{tpu_custom_call.1} parent=5 // pred_region
        // Predicated region
        $region17: #{tpu_custom_call.1} parent=15 // pred_check
          %p267 = pneg %p60
        $region18: #{tpu_custom_call.1} parent=15 // pred_check_branch
          %269 = sbr.rel (%p267) target = $region20
        $region19: #{tpu_custom_call.1} parent=15 // pred_region
          %s270 = sand.u32 %s50, 1
          %s271 = scalar_lea.sflag [#allocation4], %s270
          %s272 = sand.u32 %s50, 1
          %s273 = smul.addr %s272, 8
          %s274 = scalar_lea.vmem [#allocation3], %s273
          %s276 = ssub.s32 128, 128
          %277 = vsyncadd %s271, %s276
          %s278 = smul.addr %s35, 128
          %s279 = scalar_lea.hbm %s0, %s278
          %s281 = sshll.u32 %s274, 4
          %s282 = int_to_ptr.vmem [resolvable:$true] %s281
          %284 = dma.hbm_to_vmem [thread:$0]  %s279, 128, %s282, %s271
        $region20: #{tpu_custom_call.1} parent=15 // pred_fallthru
          _
        // Predicated region
        $region21: #{tpu_custom_call.1} parent=15 // pred_check
          %p285 = pneg %p86
        $region22: #{tpu_custom_call.1} parent=15 // pred_check_branch
          %287 = sbr.rel (%p285) target = $region24
        $region23: #{tpu_custom_call.1} parent=15 // pred_region
          %s288 = sand.u32 %s28, 1
          %s289 = scalar_lea.sflag [#allocation7], %s288
          %s290 = sand.u32 %s76, 1
          %s291 = scalar_lea.vmem [#allocation6], %s290
          %s293 = ssub.s32 16, 16
          %294 = vsyncadd %s289, %s293
          %s295 = smul.addr %s35, 16
          %s296 = scalar_lea.hbm %s1, %s295
          %s298 = sshll.u32 %s291, 4
          %s299 = int_to_ptr.vmem [resolvable:$true] %s298
          %301 = dma.hbm_to_vmem [thread:$0]  %s296, 16, %s299, %s289
        $region24: #{tpu_custom_call.1} parent=15 // pred_fallthru
          _
        // Predicated region
        $region25: #{tpu_custom_call.1} parent=15 // pred_check
          %p302 = pneg %p112
        $region26: #{tpu_custom_call.1} parent=15 // pred_check_branch
          %304 = sbr.rel (%p302) target = $region28
        $region27: #{tpu_custom_call.1} parent=15 // pred_region
          %s305 = sand.u32 %s28, 1
          %s306 = scalar_lea.sflag [#allocation7], %s305
          %s307 = sand.u32 %s102, 1
          %s308 = smul.addr %s307, 192
          %s309 = scalar_lea.vmem [#allocation8], %s308
          %s311 = ssub.s32 3072, 3072
          %312 = vsyncadd %s306, %s311
          %s313 = smul.addr %s36, 48
          %s314 = smul.addr %s313, 64
          %s315 = scalar_lea.hbm %s2, %s314
          %s316 = sshll.u32 %s309, 4
          %s317 = int_to_ptr.vmem [resolvable:$true] %s316
          %322 = dma.hbm_to_vmem [thread:$0]  %s315, 3072, %s317, %s306, 192, 192, 12
        $region28: #{tpu_custom_call.1} parent=15 // pred_fallthru
          _
        // Predicated region
        $region29: #{tpu_custom_call.1} parent=15 // pred_check
          %p323 = pneg %p138
        $region30: #{tpu_custom_call.1} parent=15 // pred_check_branch
          %325 = sbr.rel (%p323) target = $region32
        $region31: #{tpu_custom_call.1} parent=15 // pred_region
          %s326 = sand.u32 %s28, 1
          %s327 = scalar_lea.sflag [#allocation10], %s326
          %s328 = sand.u32 %s128, 1
          %s329 = smul.addr %s328, 64
          %s330 = scalar_lea.vmem [#allocation9], %s329
          %s332 = ssub.s32 1024, 1024
          %333 = vsyncadd %s327, %s332
          %s334 = smul.addr %s36, 16
          %s335 = smul.addr %s334, 64
          %s336 = scalar_lea.hbm %s3, %s335
          %s337 = sshll.u32 %s330, 4
          %s338 = int_to_ptr.vmem [resolvable:$true] %s337
          %343 = dma.hbm_to_vmem [thread:$0]  %s336, 1024, %s338, %s327, 64, 64, 4
        $region32: #{tpu_custom_call.1} parent=15 // pred_fallthru
          _
        // Predicated region
        $region33: #{tpu_custom_call.1} parent=15 // pred_check
          %p344 = pneg %p164
        $region34: #{tpu_custom_call.1} parent=15 // pred_check_branch
          %346 = sbr.rel (%p344) target = $region36
        $region35: #{tpu_custom_call.1} parent=15 // pred_region
          %s347 = sand.u32 %s28, 1
          %s348 = scalar_lea.sflag [#allocation10], %s347
          %s349 = sand.u32 %s154, 1
          %s350 = smul.addr %s349, 256
          %s351 = scalar_lea.vmem [#allocation11], %s350
          %s353 = ssub.s32 4096, 4096
          %354 = vsyncadd %s348, %s353
          %s355 = smul.addr %s36, 64
          %s356 = smul.addr %s355, 64
          %s357 = scalar_lea.hbm %s4, %s356
          %s358 = sshll.u32 %s351, 4
          %s359 = int_to_ptr.vmem [resolvable:$true] %s358
          %364 = dma.hbm_to_vmem [thread:$0]  %s357, 4096, %s359, %s348, 256, 256, 16
        $region36: #{tpu_custom_call.1} parent=15 // pred_fallthru
          _
        // Predicated region
        $region37: #{tpu_custom_call.1} parent=15 // pred_check
          %p365 = pneg %p190
        $region38: #{tpu_custom_call.1} parent=15 // pred_check_branch
          %367 = sbr.rel (%p365) target = $region40
        $region39: #{tpu_custom_call.1} parent=15 // pred_region
          %s368 = sand.u32 %s28, 1
          %s369 = scalar_lea.sflag [#allocation13], %s368
          %s370 = sand.u32 %s180, 1
          %s371 = smul.addr %s370, 256
          %s372 = scalar_lea.vmem [#allocation12], %s371
          %s374 = ssub.s32 4096, 4096
          %375 = vsyncadd %s369, %s374
          %s376 = smul.addr %s36, 64
          %s377 = smul.addr %s376, 64
          %s378 = scalar_lea.hbm %s5, %s377
          %s379 = sshll.u32 %s372, 4
          %s380 = int_to_ptr.vmem [resolvable:$true] %s379
          %385 = dma.hbm_to_vmem [thread:$0]  %s378, 4096, %s380, %s369, 64, 64, 4
        $region40: #{tpu_custom_call.1} parent=15 // pred_fallthru
          _
        // Predicated region
        $region41: #{tpu_custom_call.1} parent=15 // pred_check
          %p386 = pneg %p216
        $region42: #{tpu_custom_call.1} parent=15 // pred_check_branch
          %388 = sbr.rel (%p386) target = $region44
        $region43: #{tpu_custom_call.1} parent=15 // pred_region
          %s389 = sand.u32 %s28, 1
          %s390 = scalar_lea.sflag [#allocation13], %s389
          %s391 = sand.u32 %s206, 1
          %s392 = smul.addr %s391, 32
          %s393 = scalar_lea.vmem [#allocation14], %s392
          %s395 = ssub.s32 512, 512
          %396 = vsyncadd %s390, %s395
          %s397 = smul.addr %s36, 4
          %s398 = smul.addr %s397, 128
          %s399 = scalar_lea.hbm %s6, %s398
          %s401 = sshll.u32 %s393, 4
          %s402 = int_to_ptr.vmem [resolvable:$true] %s401
          %404 = dma.hbm_to_vmem [thread:$0]  %s399, 512, %s402, %s390
        $region44: #{tpu_custom_call.1} parent=15 // pred_fallthru
          _
      $region16: #{tpu_custom_call.1} parent=5 // pred_fallthru
        _
      %p405 = scmp.le.s32.totalorder 1, %s28
      %p406 = scmp.lt.s32.totalorder %s28, 5
      %p407 = pnand %p405, %p406
      %p408 = pneg %p407
      // Predicated region
      $region45: #{tpu_custom_call.1} parent=5 // pred_check
        _
      $region46: #{tpu_custom_call.1} parent=5 // pred_check_branch
        %410 = sbr.rel (%p407) target = $region48
      $region47: #{tpu_custom_call.1} parent=5 // pred_region
        %s411 = ssub.s32 %s28, 1
        %s412 = sand.u32 %s53, 1
        %s413 = scalar_lea.sflag [#allocation4], %s412
        %s414 = sand.u32 %s53, 1
        %s415 = smul.addr %s414, 8
        %s416 = scalar_lea.vmem [#allocation3], %s415
        // Predicated region
        $region49: #{tpu_custom_call.1} parent=47 // pred_check
          %p417 = pneg %p66
        $region50: #{tpu_custom_call.1} parent=47 // pred_check_branch
          %419 = sbr.rel (%p417) target = $region52
        $region51: #{tpu_custom_call.1} parent=47 // pred_region
          %420 = dma.done %s413, 128
        $region52: #{tpu_custom_call.1} parent=47 // pred_fallthru
          _
        %s421 = sand.u32 %s33, 1
        %s422 = scalar_lea.sflag [#allocation7], %s421
        %s423 = sand.u32 %s79, 1
        %s424 = scalar_lea.vmem [#allocation6], %s423
        // Predicated region
        $region53: #{tpu_custom_call.1} parent=47 // pred_check
          %p425 = pneg %p92
        $region54: #{tpu_custom_call.1} parent=47 // pred_check_branch
          %427 = sbr.rel (%p425) target = $region56
        $region55: #{tpu_custom_call.1} parent=47 // pred_region
          %428 = dma.done %s422, 16
        $region56: #{tpu_custom_call.1} parent=47 // pred_fallthru
          _
        %s429 = sand.u32 %s33, 1
        %s430 = scalar_lea.sflag [#allocation7], %s429
        %s431 = sand.u32 %s105, 1
        %s432 = smul.addr %s431, 192
        %s433 = scalar_lea.vmem [#allocation8], %s432
        // Predicated region
        $region57: #{tpu_custom_call.1} parent=47 // pred_check
          %p434 = pneg %p118
        $region58: #{tpu_custom_call.1} parent=47 // pred_check_branch
          %436 = sbr.rel (%p434) target = $region60
        $region59: #{tpu_custom_call.1} parent=47 // pred_region
          %437 = dma.done %s430, 3072
        $region60: #{tpu_custom_call.1} parent=47 // pred_fallthru
          _
        %s438 = sand.u32 %s33, 1
        %s439 = scalar_lea.sflag [#allocation10], %s438
        %s440 = sand.u32 %s131, 1
        %s441 = smul.addr %s440, 64
        %s442 = scalar_lea.vmem [#allocation9], %s441
        // Predicated region
        $region61: #{tpu_custom_call.1} parent=47 // pred_check
          %p443 = pneg %p144
        $region62: #{tpu_custom_call.1} parent=47 // pred_check_branch
          %445 = sbr.rel (%p443) target = $region64
        $region63: #{tpu_custom_call.1} parent=47 // pred_region
          %446 = dma.done %s439, 1024
        $region64: #{tpu_custom_call.1} parent=47 // pred_fallthru
          _
        %s447 = sand.u32 %s33, 1
        %s448 = scalar_lea.sflag [#allocation10], %s447
        %s449 = sand.u32 %s157, 1
        %s450 = smul.addr %s449, 256
        %s451 = scalar_lea.vmem [#allocation11], %s450
        // Predicated region
        $region65: #{tpu_custom_call.1} parent=47 // pred_check
          %p452 = pneg %p170
        $region66: #{tpu_custom_call.1} parent=47 // pred_check_branch
          %454 = sbr.rel (%p452) target = $region68
        $region67: #{tpu_custom_call.1} parent=47 // pred_region
          %455 = dma.done %s448, 4096
        $region68: #{tpu_custom_call.1} parent=47 // pred_fallthru
          _
        %s456 = sand.u32 %s33, 1
        %s457 = scalar_lea.sflag [#allocation13], %s456
        %s458 = sand.u32 %s183, 1
        %s459 = smul.addr %s458, 256
        %s460 = scalar_lea.vmem [#allocation12], %s459
        // Predicated region
        $region69: #{tpu_custom_call.1} parent=47 // pred_check
          %p461 = pneg %p196
        $region70: #{tpu_custom_call.1} parent=47 // pred_check_branch
          %463 = sbr.rel (%p461) target = $region72
        $region71: #{tpu_custom_call.1} parent=47 // pred_region
          %464 = dma.done %s457, 4096
        $region72: #{tpu_custom_call.1} parent=47 // pred_fallthru
          _
        %s465 = sand.u32 %s33, 1
        %s466 = scalar_lea.sflag [#allocation13], %s465
        %s467 = sand.u32 %s209, 1
        %s468 = smul.addr %s467, 32
        %s469 = scalar_lea.vmem [#allocation14], %s468
        // Predicated region
        $region73: #{tpu_custom_call.1} parent=47 // pred_check
          %p470 = pneg %p222
        $region74: #{tpu_custom_call.1} parent=47 // pred_check_branch
          %472 = sbr.rel (%p470) target = $region76
        $region75: #{tpu_custom_call.1} parent=47 // pred_region
          %473 = dma.done %s466, 512
        $region76: #{tpu_custom_call.1} parent=47 // pred_fallthru
          _
        %s474 = sand.u32 %s53, 1
        %s475 = scalar_lea.sflag [#allocation4], %s474
        %s476 = sand.u32 %s53, 1
        %s477 = smul.addr %s476, 8
        %s478 = scalar_lea.vmem [#allocation3], %s477
        %p479 = pneg %p66
        %p480 = pneg %p63
        %s481 = sand.u32 %s33, 1
        %s482 = scalar_lea.sflag [#allocation7], %s481
        %s483 = sand.u32 %s79, 1
        %s484 = scalar_lea.vmem [#allocation6], %s483
        %p485 = pneg %p92
        %p486 = pneg %p89
        %s487 = sand.u32 %s33, 1
        %s488 = scalar_lea.sflag [#allocation7], %s487
        %s489 = sand.u32 %s105, 1
        %s490 = smul.addr %s489, 192
        %s491 = scalar_lea.vmem [#allocation8], %s490
        %p492 = pneg %p118
        %p493 = pneg %p115
        %s494 = sand.u32 %s33, 1
        %s495 = scalar_lea.sflag [#allocation10], %s494
        %s496 = sand.u32 %s131, 1
        %s497 = smul.addr %s496, 64
        %s498 = scalar_lea.vmem [#allocation9], %s497
        %p499 = pneg %p144
        %p500 = pneg %p141
        %s501 = sand.u32 %s33, 1
        %s502 = scalar_lea.sflag [#allocation10], %s501
        %s503 = sand.u32 %s157, 1
        %s504 = smul.addr %s503, 256
        %s505 = scalar_lea.vmem [#allocation11], %s504
        %p506 = pneg %p170
        %p507 = pneg %p167
        %s508 = sand.u32 %s33, 1
        %s509 = scalar_lea.sflag [#allocation13], %s508
        %s510 = sand.u32 %s183, 1
        %s511 = smul.addr %s510, 256
        %s512 = scalar_lea.vmem [#allocation12], %s511
        %p513 = pneg %p196
        %p514 = pneg %p193
        %s515 = sand.u32 %s33, 1
        %s516 = scalar_lea.sflag [#allocation13], %s515
        %s517 = sand.u32 %s209, 1
        %s518 = smul.addr %s517, 32
        %s519 = scalar_lea.vmem [#allocation14], %s518
        %p520 = pneg %p222
        %p521 = pneg %p219
        %p522 = pneg %p248
        %p523 = pneg %p245
        %s524 = sand.u32 %s235, 1
        %s525 = scalar_lea.sflag [#allocation5], %s524
        %s526 = sand.u32 %s235, 1
        %s527 = scalar_lea.vmem [#allocation15], %s526
        %p529 = scmp.eq.s32.totalorder %s38, 0
        // Predicated region
        $region77: #{tpu_custom_call.1} parent=47 // pred_check
          %p530 = pneg %p529
        $region78: #{tpu_custom_call.1} parent=47 // pred_check_branch
          %532 = sbr.rel (%p530) target = $region80
        $region79: #{tpu_custom_call.1} parent=47 // pred_region
          %v533 = vld [vmem:[%s416] sm:$0xff]
          %534 = vst [vmem:[#allocation2] sm:$0xff] %v533
        $region80: #{tpu_custom_call.1} parent=47 // pred_fallthru
          _
        %v535 = vld [vmem:[#allocation2] sm:$0xff]
        %v536 = vld [vmem:[%s469] sm:$0xff]
        %v537 = vld [vmem:[%s469 + $0x8] sm:$0xff]
        %v538 = vld [vmem:[%s469 + $0x10] sm:$0xff]
        %v539 = vld [vmem:[%s469 + $0x18] sm:$0xff]
        %v540 = vld [vmem:[%s433] sm:$0xff]
        %v541 = vld [vmem:[%s433 + $0x8] sm:$0xf]
        %v542 = vld [vmem:[%s433 + $0xc] sm:$0xff]
        %v543 = vld [vmem:[%s433 + $0x14] sm:$0xf]
        %v544 = vld [vmem:[%s433 + $0x18] sm:$0xff]
        %v545 = vld [vmem:[%s433 + $0x20] sm:$0xf]
        %v546 = vld [vmem:[%s433 + $0x24] sm:$0xff]
        %v547 = vld [vmem:[%s433 + $0x2c] sm:$0xf]
        %v548 = vld [vmem:[%s433 + $0x30] sm:$0xff]
        %v549 = vld [vmem:[%s433 + $0x38] sm:$0xf]
        %v550 = vld [vmem:[%s433 + $0x3c] sm:$0xff]
        %v551 = vld [vmem:[%s433 + $0x44] sm:$0xf]
        %v552 = vld [vmem:[%s433 + $0x48] sm:$0xff]
        %v553 = vld [vmem:[%s433 + $0x50] sm:$0xf]
        %v554 = vld [vmem:[%s433 + $0x54] sm:$0xff]
        %v555 = vld [vmem:[%s433 + $0x5c] sm:$0xf]
        %v556 = vld [vmem:[%s433 + $0x60] sm:$0xff]
        %v557 = vld [vmem:[%s433 + $0x68] sm:$0xf]
        %v558 = vld [vmem:[%s433 + $0x6c] sm:$0xff]
        %v559 = vld [vmem:[%s433 + $0x74] sm:$0xf]
        %v560 = vld [vmem:[%s433 + $0x78] sm:$0xff]
        %v561 = vld [vmem:[%s433 + $0x80] sm:$0xf]
        %v562 = vld [vmem:[%s433 + $0x84] sm:$0xff]
        %v563 = vld [vmem:[%s433 + $0x8c] sm:$0xf]
        %v564 = vld [vmem:[%s433 + $0x90] sm:$0xff]
        %v565 = vld [vmem:[%s433 + $0x98] sm:$0xf]
        %v566 = vld [vmem:[%s433 + $0x9c] sm:$0xff]
        %v567 = vld [vmem:[%s433 + $0xa4] sm:$0xf]
        %v568 = vld [vmem:[%s433 + $0xa8] sm:$0xff]
        %v569 = vld [vmem:[%s433 + $0xb0] sm:$0xf]
        %v570 = vld [vmem:[%s433 + $0xb4] sm:$0xff]
        %v571 = vld [vmem:[%s433 + $0xbc] sm:$0xf]
        %v572 = vld [vmem:[%s442] sm:$0xf]
        %v573 = vld [vmem:[%s442 + $0x4] sm:$0xf]
        %v574 = vld [vmem:[%s442 + $0x8] sm:$0xf]
        %v575 = vld [vmem:[%s442 + $0xc] sm:$0xf]
        %v576 = vld [vmem:[%s442 + $0x10] sm:$0xf]
        %v577 = vld [vmem:[%s442 + $0x14] sm:$0xf]
        %v578 = vld [vmem:[%s442 + $0x18] sm:$0xf]
        %v579 = vld [vmem:[%s442 + $0x1c] sm:$0xf]
        %v580 = vld [vmem:[%s442 + $0x20] sm:$0xf]
        %v581 = vld [vmem:[%s442 + $0x24] sm:$0xf]
        %v582 = vld [vmem:[%s442 + $0x28] sm:$0xf]
        %v583 = vld [vmem:[%s442 + $0x2c] sm:$0xf]
        %v584 = vld [vmem:[%s442 + $0x30] sm:$0xf]
        %v585 = vld [vmem:[%s442 + $0x34] sm:$0xf]
        %v586 = vld [vmem:[%s442 + $0x38] sm:$0xf]
        %v587 = vld [vmem:[%s442 + $0x3c] sm:$0xf]
        %v588 = vld [vmem:[%s451] sm:$0xff]
        %v589 = vld [vmem:[%s451 + $0x8] sm:$0xff]
        %v590 = vld [vmem:[%s451 + $0x10] sm:$0xff]
        %v591 = vld [vmem:[%s451 + $0x18] sm:$0xff]
        %v592 = vld [vmem:[%s451 + $0x20] sm:$0xff]
        %v593 = vld [vmem:[%s451 + $0x28] sm:$0xff]
        %v594 = vld [vmem:[%s451 + $0x30] sm:$0xff]
        %v595 = vld [vmem:[%s451 + $0x38] sm:$0xff]
        %v596 = vld [vmem:[%s451 + $0x40] sm:$0xff]
        %v597 = vld [vmem:[%s451 + $0x48] sm:$0xff]
        %v598 = vld [vmem:[%s451 + $0x50] sm:$0xff]
        %v599 = vld [vmem:[%s451 + $0x58] sm:$0xff]
        %v600 = vld [vmem:[%s451 + $0x60] sm:$0xff]
        %v601 = vld [vmem:[%s451 + $0x68] sm:$0xff]
        %v602 = vld [vmem:[%s451 + $0x70] sm:$0xff]
        %v603 = vld [vmem:[%s451 + $0x78] sm:$0xff]
        %v604 = vld [vmem:[%s451 + $0x80] sm:$0xff]
        %v605 = vld [vmem:[%s451 + $0x88] sm:$0xff]
        %v606 = vld [vmem:[%s451 + $0x90] sm:$0xff]
        %v607 = vld [vmem:[%s451 + $0x98] sm:$0xff]
        %v608 = vld [vmem:[%s451 + $0xa0] sm:$0xff]
        %v609 = vld [vmem:[%s451 + $0xa8] sm:$0xff]
        %v610 = vld [vmem:[%s451 + $0xb0] sm:$0xff]
        %v611 = vld [vmem:[%s451 + $0xb8] sm:$0xff]
        %v612 = vld [vmem:[%s451 + $0xc0] sm:$0xff]
        %v613 = vld [vmem:[%s451 + $0xc8] sm:$0xff]
        %v614 = vld [vmem:[%s451 + $0xd0] sm:$0xff]
        %v615 = vld [vmem:[%s451 + $0xd8] sm:$0xff]
        %v616 = vld [vmem:[%s451 + $0xe0] sm:$0xff]
        %v617 = vld [vmem:[%s451 + $0xe8] sm:$0xff]
        %v618 = vld [vmem:[%s451 + $0xf0] sm:$0xff]
        %v619 = vld [vmem:[%s451 + $0xf8] sm:$0xff]
        %v620 = vld [vmem:[%s460] sm:$0xf]
        %v621 = vld [vmem:[%s460 + $0x4] sm:$0xf]
        %v622 = vld [vmem:[%s460 + $0x8] sm:$0xf]
        %v623 = vld [vmem:[%s460 + $0xc] sm:$0xf]
        %v624 = vld [vmem:[%s460 + $0x10] sm:$0xf]
        %v625 = vld [vmem:[%s460 + $0x14] sm:$0xf]
        %v626 = vld [vmem:[%s460 + $0x18] sm:$0xf]
        %v627 = vld [vmem:[%s460 + $0x1c] sm:$0xf]
        %v628 = vld [vmem:[%s460 + $0x20] sm:$0xf]
        %v629 = vld [vmem:[%s460 + $0x24] sm:$0xf]
        %v630 = vld [vmem:[%s460 + $0x28] sm:$0xf]
        %v631 = vld [vmem:[%s460 + $0x2c] sm:$0xf]
        %v632 = vld [vmem:[%s460 + $0x30] sm:$0xf]
        %v633 = vld [vmem:[%s460 + $0x34] sm:$0xf]
        %v634 = vld [vmem:[%s460 + $0x38] sm:$0xf]
        %v635 = vld [vmem:[%s460 + $0x3c] sm:$0xf]
        %v636 = vld [vmem:[%s460 + $0x40] sm:$0xf]
        %v637 = vld [vmem:[%s460 + $0x44] sm:$0xf]
        %v638 = vld [vmem:[%s460 + $0x48] sm:$0xf]
        %v639 = vld [vmem:[%s460 + $0x4c] sm:$0xf]
        %v640 = vld [vmem:[%s460 + $0x50] sm:$0xf]
        %v641 = vld [vmem:[%s460 + $0x54] sm:$0xf]
        %v642 = vld [vmem:[%s460 + $0x58] sm:$0xf]
        %v643 = vld [vmem:[%s460 + $0x5c] sm:$0xf]
        %v644 = vld [vmem:[%s460 + $0x60] sm:$0xf]
        %v645 = vld [vmem:[%s460 + $0x64] sm:$0xf]
        %v646 = vld [vmem:[%s460 + $0x68] sm:$0xf]
        %v647 = vld [vmem:[%s460 + $0x6c] sm:$0xf]
        %v648 = vld [vmem:[%s460 + $0x70] sm:$0xf]
        %v649 = vld [vmem:[%s460 + $0x74] sm:$0xf]
        %v650 = vld [vmem:[%s460 + $0x78] sm:$0xf]
        %v651 = vld [vmem:[%s460 + $0x7c] sm:$0xf]
        %v652 = vld [vmem:[%s460 + $0x80] sm:$0xf]
        %v653 = vld [vmem:[%s460 + $0x84] sm:$0xf]
        %v654 = vld [vmem:[%s460 + $0x88] sm:$0xf]
        %v655 = vld [vmem:[%s460 + $0x8c] sm:$0xf]
        %v656 = vld [vmem:[%s460 + $0x90] sm:$0xf]
        %v657 = vld [vmem:[%s460 + $0x94] sm:$0xf]
        %v658 = vld [vmem:[%s460 + $0x98] sm:$0xf]
        %v659 = vld [vmem:[%s460 + $0x9c] sm:$0xf]
        %v660 = vld [vmem:[%s460 + $0xa0] sm:$0xf]
        %v661 = vld [vmem:[%s460 + $0xa4] sm:$0xf]
        %v662 = vld [vmem:[%s460 + $0xa8] sm:$0xf]
        %v663 = vld [vmem:[%s460 + $0xac] sm:$0xf]
        %v664 = vld [vmem:[%s460 + $0xb0] sm:$0xf]
        %v665 = vld [vmem:[%s460 + $0xb4] sm:$0xf]
        %v666 = vld [vmem:[%s460 + $0xb8] sm:$0xf]
        %v667 = vld [vmem:[%s460 + $0xbc] sm:$0xf]
        %v668 = vld [vmem:[%s460 + $0xc0] sm:$0xf]
        %v669 = vld [vmem:[%s460 + $0xc4] sm:$0xf]
        %v670 = vld [vmem:[%s460 + $0xc8] sm:$0xf]
        %v671 = vld [vmem:[%s460 + $0xcc] sm:$0xf]
        %v672 = vld [vmem:[%s460 + $0xd0] sm:$0xf]
        %v673 = vld [vmem:[%s460 + $0xd4] sm:$0xf]
        %v674 = vld [vmem:[%s460 + $0xd8] sm:$0xf]
        %v675 = vld [vmem:[%s460 + $0xdc] sm:$0xf]
        %v676 = vld [vmem:[%s460 + $0xe0] sm:$0xf]
        %v677 = vld [vmem:[%s460 + $0xe4] sm:$0xf]
        %v678 = vld [vmem:[%s460 + $0xe8] sm:$0xf]
        %v679 = vld [vmem:[%s460 + $0xec] sm:$0xf]
        %v680 = vld [vmem:[%s460 + $0xf0] sm:$0xf]
        %v681 = vld [vmem:[%s460 + $0xf4] sm:$0xf]
        %v682 = vld [vmem:[%s460 + $0xf8] sm:$0xf]
        %v683 = vld [vmem:[%s460 + $0xfc] sm:$0xf]
        %v684 = vld [vmem:[%s424] sm:$0x1]
        %v685 = vsub.f32 %v684, 1.0
        %v686 = vmul.f32 %v685, 1e+09
        %v687 = vpack.c.bf16 %v535, %v535
        %v688 = vlaneseq
        %v689 = vshrl.u32 %v688, 7
        %v690 = vsub.s32 0, %v689
        %v691 = vrot.slane %v536, %v690
        %v692 = vlaneseq
        %v693 = vshrl.u32 %v692, 7
        %v694 = vsub.s32 0, %v693
        %v695 = vrot.slane %v537, %v694
        %v696 = vlaneseq
        %v697 = vshrl.u32 %v696, 7
        %v698 = vsub.s32 0, %v697
        %v699 = vrot.slane %v538, %v698
        %v732 = vunpack.c.l.b16 %v540
        %v733 = vunpack.c.h.b16 %v540
        %v734 = vunpack.c.l.b16 %v541
        %v735 = vunpack.c.l.b16 %v542
        %v736 = vunpack.c.h.b16 %v542
        %v737 = vunpack.c.l.b16 %v543
        %v738 = vunpack.c.l.b16 %v544
        %v739 = vunpack.c.h.b16 %v544
        %v740 = vunpack.c.l.b16 %v545
        %v741 = vunpack.c.l.b16 %v546
        %v742 = vunpack.c.h.b16 %v546
        %v743 = vunpack.c.l.b16 %v547
        %v744 = vunpack.c.l.b16 %v548
        %v745 = vunpack.c.h.b16 %v548
        %v746 = vunpack.c.l.b16 %v549
        %v747 = vunpack.c.l.b16 %v550
        %v748 = vunpack.c.h.b16 %v550
        %v749 = vunpack.c.l.b16 %v551
        %v750 = vunpack.c.l.b16 %v552
        %v751 = vunpack.c.h.b16 %v552
        %v752 = vunpack.c.l.b16 %v553
        %v753 = vunpack.c.l.b16 %v554
        %v754 = vunpack.c.h.b16 %v554
        %v755 = vunpack.c.l.b16 %v555
        %v756 = vunpack.c.l.b16 %v556
        %v757 = vunpack.c.h.b16 %v556
        %v758 = vunpack.c.l.b16 %v557
        %v759 = vunpack.c.l.b16 %v558
        %v760 = vunpack.c.h.b16 %v558
        %v761 = vunpack.c.l.b16 %v559
        %v762 = vunpack.c.l.b16 %v560
        %v763 = vunpack.c.h.b16 %v560
        %v764 = vunpack.c.l.b16 %v561
        %v765 = vunpack.c.l.b16 %v562
        %v766 = vunpack.c.h.b16 %v562
        %v767 = vunpack.c.l.b16 %v563
        %v768 = vunpack.c.l.b16 %v564
        %v769 = vunpack.c.h.b16 %v564
        %v770 = vunpack.c.l.b16 %v565
        %v771 = vunpack.c.l.b16 %v566
        %v772 = vunpack.c.h.b16 %v566
        %v773 = vunpack.c.l.b16 %v567
        %v774 = vunpack.c.l.b16 %v568
        %v775 = vunpack.c.h.b16 %v568
        %v776 = vunpack.c.l.b16 %v569
        %v777 = vunpack.c.l.b16 %v570
        %v778 = vunpack.c.h.b16 %v570
        %v779 = vunpack.c.l.b16 %v571
        %v780 = vpack.c.b16 %v735, %v732
        %v781 = vpack.c.b16 %v736, %v733
        %v782 = vpack.c.b16 %v737, %v734
        %v783 = vpack.c.b16 %v741, %v738
        %v784 = vpack.c.b16 %v742, %v739
        %v785 = vpack.c.b16 %v743, %v740
        %v786 = vpack.c.b16 %v747, %v744
        %v787 = vpack.c.b16 %v748, %v745
        %v788 = vpack.c.b16 %v749, %v746
        %v789 = vpack.c.b16 %v753, %v750
        %v790 = vpack.c.b16 %v754, %v751
        %v791 = vpack.c.b16 %v755, %v752
        %v792 = vpack.c.b16 %v759, %v756
        %v793 = vpack.c.b16 %v760, %v757
        %v794 = vpack.c.b16 %v761, %v758
        %v795 = vpack.c.b16 %v765, %v762
        %v796 = vpack.c.b16 %v766, %v763
        %v797 = vpack.c.b16 %v767, %v764
        %v798 = vpack.c.b16 %v771, %v768
        %v799 = vpack.c.b16 %v772, %v769
        %v800 = vpack.c.b16 %v773, %v770
        %v801 = vpack.c.b16 %v777, %v774
        %v802 = vpack.c.b16 %v778, %v775
        %v803 = vpack.c.b16 %v779, %v776
        %828 = vmatprep.subr.bf16.mxu0 %v802
        %829 = vmatpush1.bf16.msra.mxu0 %v801
        %830 = vmatprep.subr.bf16.mxu0 %v799
        %831 = vmatpush1.bf16.msra.mxu0 %v798
        %832 = vmatprep.subr.bf16.mxu0 %v796
        %833 = vmatpush1.bf16.msra.mxu0 %v795
        %834 = vmatprep.subr.bf16.mxu0 %v793
        %835 = vmatpush1.bf16.msra.mxu0 %v792
        %836 = vmatprep.subr.bf16.mxu0 %v790
        %837 = vmatpush1.bf16.msra.mxu0 %v789
        %838 = vmatprep.subr.bf16.mxu0 %v787
        %839 = vmatpush1.bf16.msra.mxu0 %v786
        %840 = vmatprep.subr.bf16.mxu0 %v784
        %841 = vmatpush1.bf16.msra.mxu0 %v783
        %842 = vmatprep.subr.bf16.mxu0 %v781
        %843 = vmatpush1.bf16.msra.mxu0 %v780
        %844 = vmatprep.subr.bf16.mxu0 0
        %845 = vmatpush2.bf16.msra.mxu0 0
        %846 = vmatprep.subr.bf16.mxu0 0
        %847 = vmatpush2.bf16.msra.mxu0 0
        %848 = vmatprep.subr.bf16.mxu0 0
        %849 = vmatpush2.bf16.msra.mxu0 0
        %850 = vmatprep.subr.bf16.mxu0 0
        %851 = vmatpush2.bf16.msra.mxu0 0
        %852 = vmatprep.subr.bf16.mxu0 0
        %853 = vmatpush2.bf16.msra.mxu0 0
        %854 = vmatprep.subr.bf16.mxu0 0
        %855 = vmatpush2.bf16.msra.mxu0 0
        %856 = vmatprep.subr.bf16.mxu0 0
        %857 = vmatpush2.bf16.msra.mxu0 0
        %858 = vmatprep.subr.bf16.mxu0 0
        %859 = vmatpush2.bf16.msra.mxu0 0
        %860 = vmatprep.mubr.bf16.mxu0 0
        %861 = vmatmul.mubr.bf16.gmra.mxu0 %v687
        %v862 = vpop.f32.mrf.mxu0
        %v863 = vadd.f32 %v691, %v862
        %v864 = vpop.f32.mrf.mxu0
        %v865 = vadd.f32 %v695, %v864
        %v866 = vpop.f32.mrf.mxu0
        %v867 = vpop.f32.mrf.mxu0
        %868 = vdwg.mxu0
        %869 = vmatprep.subr.bf16.mxu0 0
        %870 = vmatpush1.bf16.msra.mxu0 %v803
        %871 = vmatprep.subr.bf16.mxu0 0
        %872 = vmatpush1.bf16.msra.mxu0 %v800
        %873 = vmatprep.subr.bf16.mxu0 0
        %874 = vmatpush1.bf16.msra.mxu0 %v797
        %875 = vmatprep.subr.bf16.mxu0 0
        %876 = vmatpush1.bf16.msra.mxu0 %v794
        %877 = vmatprep.subr.bf16.mxu0 0
        %878 = vmatpush1.bf16.msra.mxu0 %v791
        %879 = vmatprep.subr.bf16.mxu0 0
        %880 = vmatpush1.bf16.msra.mxu0 %v788
        %881 = vmatprep.subr.bf16.mxu0 0
        %882 = vmatpush1.bf16.msra.mxu0 %v785
        %883 = vmatprep.subr.bf16.mxu0 0
        %884 = vmatpush1.bf16.msra.mxu0 %v782
        %885 = vmatprep.subr.bf16.mxu0 0
        %886 = vmatpush2.bf16.msra.mxu0 0
        %887 = vmatprep.subr.bf16.mxu0 0
        %888 = vmatpush2.bf16.msra.mxu0 0
        %889 = vmatprep.subr.bf16.mxu0 0
        %890 = vmatpush2.bf16.msra.mxu0 0
        %891 = vmatprep.subr.bf16.mxu0 0
        %892 = vmatpush2.bf16.msra.mxu0 0
        %893 = vmatprep.subr.bf16.mxu0 0
        %894 = vmatpush2.bf16.msra.mxu0 0
        %895 = vmatprep.subr.bf16.mxu0 0
        %896 = vmatpush2.bf16.msra.mxu0 0
        %897 = vmatprep.subr.bf16.mxu0 0
        %898 = vmatpush2.bf16.msra.mxu0 0
        %899 = vmatprep.subr.bf16.mxu0 0
        %900 = vmatpush2.bf16.msra.mxu0 0
        %901 = vmatprep.mubr.bf16.mxu0 0
        %902 = vmatmul.mubr.bf16.gmra.mxu0 %v687
        %v903 = vpop.f32.mrf.mxu0
        %v904 = vadd.f32 %v699, %v903
        %v905 = vpop.f32.mrf.mxu0
        %v906 = vpop.f32.mrf.mxu0
        %v907 = vpop.f32.mrf.mxu0
        %908 = vdwg.mxu0
        %910 = vrot.lane.b32.xlu0 %v863, 64
        %v911 = vpop.permute.xlu0 %910
        %v913 = vcombine.high %v863, 0.0
        %v915 = vunpack.c.l.s4 1983009808
        %v916 = vunpack.c.0.s8 %v915
        %v917 = vlaneseq
        %v918 = vshrl.u32 %v917, 7
        %v919 = vsub.s32 %v916, %v918
        %v920 = vrot.slane %v863, %v919
        %v922 = vunpack.c.l.s4 1983009808
        %v923 = vunpack.c.0.s8 %v922
        %v924 = vlaneseq
        %v925 = vshrl.u32 %v924, 7
        %v926 = vsub.s32 %v923, %v925
        %v927 = vrot.slane %v913, %v926
        %v928 = vcombine.high %v911, 0.0
        %v930 = vunpack.c.l.s4 1983009808
        %v931 = vunpack.c.0.s8 %v930
        %v932 = vlaneseq
        %v933 = vshrl.u32 %v932, 7
        %v934 = vsub.s32 %v931, %v933
        %v935 = vrot.slane %v911, %v934
        %v937 = vunpack.c.l.s4 1983009808
        %v938 = vunpack.c.0.s8 %v937
        %v939 = vlaneseq
        %v940 = vshrl.u32 %v939, 7
        %v941 = vsub.s32 %v938, %v940
        %v942 = vrot.slane %v928, %v941
        %v943 = vcombine.low %v920, %v935
        %v944 = vcombine.high %v920, %v935
        %v946 = vunpack.c.l.s4 1934713408
        %v947 = vunpack.c.0.s8 %v946
        %v948 = vlaneseq
        %v949 = vshrl.u32 %v948, 7
        %v950 = vsub.s32 %v947, %v949
        %v951 = vrot.slane %v943, %v950
        %v953 = vunpack.c.l.s4 1934713408
        %v954 = vunpack.c.0.s8 %v953
        %v955 = vlaneseq
        %v956 = vshrl.u32 %v955, 7
        %v957 = vsub.s32 %v954, %v956
        %v958 = vrot.slane %v944, %v957
        %v959 = vcombine.low %v927, %v942
        %v960 = vcombine.high %v927, %v942
        %v962 = vunpack.c.l.s4 1934713408
        %v963 = vunpack.c.0.s8 %v962
        %v964 = vlaneseq
        %v965 = vshrl.u32 %v964, 7
        %v966 = vsub.s32 %v963, %v965
        %v967 = vrot.slane %v959, %v966
        %v969 = vunpack.c.l.s4 1934713408
        %v970 = vunpack.c.0.s8 %v969
        %v971 = vlaneseq
        %v972 = vshrl.u32 %v971, 7
        %v973 = vsub.s32 %v970, %v972
        %v974 = vrot.slane %v960, %v973
        %v975 = vcombine.high %v951, 0.0
        %v976 = vcombine.high %v958, 0.0
        %v977 = vcombine.high %v967, 0.0
        %v978 = vcombine.high %v974, 0.0
        %v979 = vcombine.low %v951, %v958
        %v981 = vunpack.c.l.s4 1983009808
        %v982 = vunpack.c.0.s8 %v981
        %v983 = vlaneseq
        %v984 = vshrl.u32 %v983, 7
        %v985 = vsub.s32 %v982, %v984
        %v986 = vrot.slane %v979, %v985
        %v987 = vcombine.low %v975, %v976
        %v989 = vunpack.c.l.s4 1983009808
        %v990 = vunpack.c.0.s8 %v989
        %v991 = vlaneseq
        %v992 = vshrl.u32 %v991, 7
        %v993 = vsub.s32 %v990, %v992
        %v994 = vrot.slane %v987, %v993
        %v995 = vcombine.low %v967, %v974
        %v997 = vunpack.c.l.s4 1983009808
        %v998 = vunpack.c.0.s8 %v997
        %v999 = vlaneseq
        %v1000 = vshrl.u32 %v999, 7
        %v1001 = vsub.s32 %v998, %v1000
        %v1002 = vrot.slane %v995, %v1001
        %v1003 = vcombine.low %v977, %v978
        %v1005 = vunpack.c.l.s4 1983009808
        %v1006 = vunpack.c.0.s8 %v1005
        %v1007 = vlaneseq
        %v1008 = vshrl.u32 %v1007, 7
        %v1009 = vsub.s32 %v1006, %v1008
        %v1010 = vrot.slane %v1003, %v1009
        %v1011 = vcombine.low %v986, %v994
        %v1013 = vunpack.c.l.s4 1934713408
        %v1014 = vunpack.c.0.s8 %v1013
        %v1015 = vlaneseq
        %v1016 = vshrl.u32 %v1015, 7
        %v1017 = vsub.s32 %v1014, %v1016
        %v1018 = vrot.slane %v1011, %v1017
        %v1019 = vcombine.low %v1002, %v1010
        %v1021 = vunpack.c.l.s4 1934713408
        %v1022 = vunpack.c.0.s8 %v1021
        %v1023 = vlaneseq
        %v1024 = vshrl.u32 %v1023, 7
        %v1025 = vsub.s32 %v1022, %v1024
        %v1026 = vrot.slane %v1019, %v1025
        %v1027 = vcombine.low %v1018, %v1026
        %v1028 = vcombine.high %v1018, %v1026
        %1030 = vrot.lane.b32.xlu0 %v865, 64
        %v1031 = vpop.permute.xlu0 %1030
        %v1033 = vcombine.high %v865, 0.0
        %v1035 = vunpack.c.l.s4 1983009808
        %v1036 = vunpack.c.0.s8 %v1035
        %v1037 = vlaneseq
        %v1038 = vshrl.u32 %v1037, 7
        %v1039 = vsub.s32 %v1036, %v1038
        %v1040 = vrot.slane %v865, %v1039
        %v1042 = vunpack.c.l.s4 1983009808
        %v1043 = vunpack.c.0.s8 %v1042
        %v1044 = vlaneseq
        %v1045 = vshrl.u32 %v1044, 7
        %v1046 = vsub.s32 %v1043, %v1045
        %v1047 = vrot.slane %v1033, %v1046
        %v1048 = vcombine.high %v1031, 0.0
        %v1050 = vunpack.c.l.s4 1983009808
        %v1051 = vunpack.c.0.s8 %v1050
        %v1052 = vlaneseq
        %v1053 = vshrl.u32 %v1052, 7
        %v1054 = vsub.s32 %v1051, %v1053
        %v1055 = vrot.slane %v1031, %v1054
        %v1057 = vunpack.c.l.s4 1983009808
        %v1058 = vunpack.c.0.s8 %v1057
        %v1059 = vlaneseq
        %v1060 = vshrl.u32 %v1059, 7
        %v1061 = vsub.s32 %v1058, %v1060
        %v1062 = vrot.slane %v1048, %v1061
        %v1063 = vcombine.low %v1040, %v1055
        %v1064 = vcombine.high %v1040, %v1055
        %v1066 = vunpack.c.l.s4 1934713408
        %v1067 = vunpack.c.0.s8 %v1066
        %v1068 = vlaneseq
        %v1069 = vshrl.u32 %v1068, 7
        %v1070 = vsub.s32 %v1067, %v1069
        %v1071 = vrot.slane %v1063, %v1070
        %v1073 = vunpack.c.l.s4 1934713408
        %v1074 = vunpack.c.0.s8 %v1073
        %v1075 = vlaneseq
        %v1076 = vshrl.u32 %v1075, 7
        %v1077 = vsub.s32 %v1074, %v1076
        %v1078 = vrot.slane %v1064, %v1077
        %v1079 = vcombine.low %v1047, %v1062
        %v1080 = vcombine.high %v1047, %v1062
        %v1082 = vunpack.c.l.s4 1934713408
        %v1083 = vunpack.c.0.s8 %v1082
        %v1084 = vlaneseq
        %v1085 = vshrl.u32 %v1084, 7
        %v1086 = vsub.s32 %v1083, %v1085
        %v1087 = vrot.slane %v1079, %v1086
        %v1089 = vunpack.c.l.s4 1934713408
        %v1090 = vunpack.c.0.s8 %v1089
        %v1091 = vlaneseq
        %v1092 = vshrl.u32 %v1091, 7
        %v1093 = vsub.s32 %v1090, %v1092
        %v1094 = vrot.slane %v1080, %v1093
        %v1095 = vcombine.high %v1071, 0.0
        %v1096 = vcombine.high %v1078, 0.0
        %v1097 = vcombine.high %v1087, 0.0
        %v1098 = vcombine.high %v1094, 0.0
        %v1099 = vcombine.low %v1071, %v1078
        %v1101 = vunpack.c.l.s4 1983009808
        %v1102 = vunpack.c.0.s8 %v1101
        %v1103 = vlaneseq
        %v1104 = vshrl.u32 %v1103, 7
        %v1105 = vsub.s32 %v1102, %v1104
        %v1106 = vrot.slane %v1099, %v1105
        %v1107 = vcombine.low %v1095, %v1096
        %v1109 = vunpack.c.l.s4 1983009808
        %v1110 = vunpack.c.0.s8 %v1109
        %v1111 = vlaneseq
        %v1112 = vshrl.u32 %v1111, 7
        %v1113 = vsub.s32 %v1110, %v1112
        %v1114 = vrot.slane %v1107, %v1113
        %v1115 = vcombine.low %v1087, %v1094
        %v1117 = vunpack.c.l.s4 1983009808
        %v1118 = vunpack.c.0.s8 %v1117
        %v1119 = vlaneseq
        %v1120 = vshrl.u32 %v1119, 7
        %v1121 = vsub.s32 %v1118, %v1120
        %v1122 = vrot.slane %v1115, %v1121
        %v1123 = vcombine.low %v1097, %v1098
        %v1125 = vunpack.c.l.s4 1983009808
        %v1126 = vunpack.c.0.s8 %v1125
        %v1127 = vlaneseq
        %v1128 = vshrl.u32 %v1127, 7
        %v1129 = vsub.s32 %v1126, %v1128
        %v1130 = vrot.slane %v1123, %v1129
        %v1131 = vcombine.low %v1106, %v1114
        %v1133 = vunpack.c.l.s4 1934713408
        %v1134 = vunpack.c.0.s8 %v1133
        %v1135 = vlaneseq
        %v1136 = vshrl.u32 %v1135, 7
        %v1137 = vsub.s32 %v1134, %v1136
        %v1138 = vrot.slane %v1131, %v1137
        %v1139 = vcombine.low %v1122, %v1130
        %v1141 = vunpack.c.l.s4 1934713408
        %v1142 = vunpack.c.0.s8 %v1141
        %v1143 = vlaneseq
        %v1144 = vshrl.u32 %v1143, 7
        %v1145 = vsub.s32 %v1142, %v1144
        %v1146 = vrot.slane %v1139, %v1145
        %v1147 = vcombine.low %v1138, %v1146
        %v1148 = vcombine.high %v1138, %v1146
        %1150 = vrot.lane.b32.xlu0 %v904, 64
        %v1151 = vpop.permute.xlu0 %1150
        %v1153 = vcombine.high %v904, 0.0
        %v1155 = vunpack.c.l.s4 1983009808
        %v1156 = vunpack.c.0.s8 %v1155
        %v1157 = vlaneseq
        %v1158 = vshrl.u32 %v1157, 7
        %v1159 = vsub.s32 %v1156, %v1158
        %v1160 = vrot.slane %v904, %v1159
        %v1162 = vunpack.c.l.s4 1983009808
        %v1163 = vunpack.c.0.s8 %v1162
        %v1164 = vlaneseq
        %v1165 = vshrl.u32 %v1164, 7
        %v1166 = vsub.s32 %v1163, %v1165
        %v1167 = vrot.slane %v1153, %v1166
        %v1168 = vcombine.high %v1151, 0.0
        %v1170 = vunpack.c.l.s4 1983009808
        %v1171 = vunpack.c.0.s8 %v1170
        %v1172 = vlaneseq
        %v1173 = vshrl.u32 %v1172, 7
        %v1174 = vsub.s32 %v1171, %v1173
        %v1175 = vrot.slane %v1151, %v1174
        %v1177 = vunpack.c.l.s4 1983009808
        %v1178 = vunpack.c.0.s8 %v1177
        %v1179 = vlaneseq
        %v1180 = vshrl.u32 %v1179, 7
        %v1181 = vsub.s32 %v1178, %v1180
        %v1182 = vrot.slane %v1168, %v1181
        %v1183 = vcombine.low %v1160, %v1175
        %v1184 = vcombine.high %v1160, %v1175
        %v1186 = vunpack.c.l.s4 1934713408
        %v1187 = vunpack.c.0.s8 %v1186
        %v1188 = vlaneseq
        %v1189 = vshrl.u32 %v1188, 7
        %v1190 = vsub.s32 %v1187, %v1189
        %v1191 = vrot.slane %v1183, %v1190
        %v1193 = vunpack.c.l.s4 1934713408
        %v1194 = vunpack.c.0.s8 %v1193
        %v1195 = vlaneseq
        %v1196 = vshrl.u32 %v1195, 7
        %v1197 = vsub.s32 %v1194, %v1196
        %v1198 = vrot.slane %v1184, %v1197
        %v1199 = vcombine.low %v1167, %v1182
        %v1200 = vcombine.high %v1167, %v1182
        %v1202 = vunpack.c.l.s4 1934713408
        %v1203 = vunpack.c.0.s8 %v1202
        %v1204 = vlaneseq
        %v1205 = vshrl.u32 %v1204, 7
        %v1206 = vsub.s32 %v1203, %v1205
        %v1207 = vrot.slane %v1199, %v1206
        %v1209 = vunpack.c.l.s4 1934713408
        %v1210 = vunpack.c.0.s8 %v1209
        %v1211 = vlaneseq
        %v1212 = vshrl.u32 %v1211, 7
        %v1213 = vsub.s32 %v1210, %v1212
        %v1214 = vrot.slane %v1200, %v1213
        %v1215 = vcombine.high %v1191, 0.0
        %v1216 = vcombine.high %v1198, 0.0
        %v1217 = vcombine.high %v1207, 0.0
        %v1218 = vcombine.high %v1214, 0.0
        %v1219 = vcombine.low %v1191, %v1198
        %v1221 = vunpack.c.l.s4 1983009808
        %v1222 = vunpack.c.0.s8 %v1221
        %v1223 = vlaneseq
        %v1224 = vshrl.u32 %v1223, 7
        %v1225 = vsub.s32 %v1222, %v1224
        %v1226 = vrot.slane %v1219, %v1225
        %v1227 = vcombine.low %v1215, %v1216
        %v1229 = vunpack.c.l.s4 1983009808
        %v1230 = vunpack.c.0.s8 %v1229
        %v1231 = vlaneseq
        %v1232 = vshrl.u32 %v1231, 7
        %v1233 = vsub.s32 %v1230, %v1232
        %v1234 = vrot.slane %v1227, %v1233
        %v1235 = vcombine.low %v1207, %v1214
        %v1237 = vunpack.c.l.s4 1983009808
        %v1238 = vunpack.c.0.s8 %v1237
        %v1239 = vlaneseq
        %v1240 = vshrl.u32 %v1239, 7
        %v1241 = vsub.s32 %v1238, %v1240
        %v1242 = vrot.slane %v1235, %v1241
        %v1243 = vcombine.low %v1217, %v1218
        %v1245 = vunpack.c.l.s4 1983009808
        %v1246 = vunpack.c.0.s8 %v1245
        %v1247 = vlaneseq
        %v1248 = vshrl.u32 %v1247, 7
        %v1249 = vsub.s32 %v1246, %v1248
        %v1250 = vrot.slane %v1243, %v1249
        %v1251 = vcombine.low %v1226, %v1234
        %v1253 = vunpack.c.l.s4 1934713408
        %v1254 = vunpack.c.0.s8 %v1253
        %v1255 = vlaneseq
        %v1256 = vshrl.u32 %v1255, 7
        %v1257 = vsub.s32 %v1254, %v1256
        %v1258 = vrot.slane %v1251, %v1257
        %v1259 = vcombine.low %v1242, %v1250
        %v1261 = vunpack.c.l.s4 1934713408
        %v1262 = vunpack.c.0.s8 %v1261
        %v1263 = vlaneseq
        %v1264 = vshrl.u32 %v1263, 7
        %v1265 = vsub.s32 %v1262, %v1264
        %v1266 = vrot.slane %v1259, %v1265
        %v1267 = vcombine.low %v1258, %v1266
        %v1268 = vcombine.high %v1258, %v1266
        %v1269 = vpack.c.bf16 %v1027, %v1027
        %v1270 = vpack.c.bf16 %v1028, %v1028
        %v1271 = vpack.c.bf16 %v1147, %v1147
        %v1272 = vpack.c.bf16 %v1148, %v1148
        %v1274 = vlaneseq
        %v1275 = vshrl.u32 %v1274, 7
        %v1276 = vsub.s32 0, %v1275
        %v1277 = vrot.slane %v686, %v1276
        %vm1279 = vcmask 523264
        %v1281 = vsel %vm1279, %v1269, 0
        %v1284 = vsel %vm1279, %v1271, 0
        %1286 = vmatprep.subr.bf16.mxu0 0
        %1287 = vmatpush1.bf16.xpose.msra.mxu0 0
        %1288 = vmatprep.subr.bf16.mxu0 0
        %1289 = vmatpush1.bf16.xpose.msra.mxu0 0
        %1290 = vmatprep.subr.bf16.mxu0 0
        %1291 = vmatpush1.bf16.xpose.msra.mxu0 0
        %1292 = vmatprep.subr.bf16.mxu0 0
        %1293 = vmatpush1.bf16.xpose.msra.mxu0 0
        %1294 = vmatprep.subr.bf16.mxu0 0
        %1295 = vmatpush1.bf16.xpose.msra.mxu0 0
        %1296 = vmatprep.subr.bf16.mxu0 0
        %1297 = vmatpush1.bf16.xpose.msra.mxu0 0
        %1298 = vmatprep.subr.bf16.mxu0 0
        %1299 = vmatpush1.bf16.xpose.msra.mxu0 0
        %1300 = vmatprep.subr.bf16.mxu0 0
        %1301 = vmatpush1.bf16.xpose.msra.mxu0 %v1284
        %1302 = vmatprep.subr.bf16.mxu0 0
        %1303 = vmatpush2.bf16.xpose.msra.mxu0 0
        %1304 = vmatprep.subr.bf16.mxu0 0
        %1305 = vmatpush2.bf16.xpose.msra.mxu0 0
        %1306 = vmatprep.subr.bf16.mxu0 0
        %1307 = vmatpush2.bf16.xpose.msra.mxu0 0
        %1308 = vmatprep.subr.bf16.mxu0 0
        %1309 = vmatpush2.bf16.xpose.msra.mxu0 0
        %1310 = vmatprep.subr.bf16.mxu0 0
        %1311 = vmatpush2.bf16.xpose.msra.mxu0 0
        %1312 = vmatprep.subr.bf16.mxu0 0
        %1313 = vmatpush2.bf16.xpose.msra.mxu0 0
        %1314 = vmatprep.subr.bf16.mxu0 0
        %1315 = vmatpush2.bf16.xpose.msra.mxu0 0
        %1316 = vmatprep.subr.bf16.mxu0 0
        %1317 = vmatpush2.bf16.xpose.msra.mxu0 0
        %1318 = vmatprep.mubr.bf16.mxu0 0
        %1319 = vmatmul.mubr.bf16.gmra.mxu0 %v1281
        %v1320 = vpop.f32.mrf.mxu0
        %v1321 = vadd.f32 %v1277, %v1320
        %v1322 = vpop.f32.mrf.mxu0
        %v1323 = vpop.f32.mrf.mxu0
        %v1324 = vpop.f32.mrf.mxu0
        %1325 = vdwg.mxu0
        %v1327 = vsel %vm1279, %v1270, 0
        %v1330 = vsel %vm1279, %v1272, 0
        %1332 = vmatprep.subr.bf16.mxu0 0
        %1333 = vmatpush1.bf16.xpose.msra.mxu0 0
        %1334 = vmatprep.subr.bf16.mxu0 0
        %1335 = vmatpush1.bf16.xpose.msra.mxu0 0
        %1336 = vmatprep.subr.bf16.mxu0 0
        %1337 = vmatpush1.bf16.xpose.msra.mxu0 0
        %1338 = vmatprep.subr.bf16.mxu0 0
        %1339 = vmatpush1.bf16.xpose.msra.mxu0 0
        %1340 = vmatprep.subr.bf16.mxu0 0
        %1341 = vmatpush1.bf16.xpose.msra.mxu0 0
        %1342 = vmatprep.subr.bf16.mxu0 0
        %1343 = vmatpush1.bf16.xpose.msra.mxu0 0
        %1344 = vmatprep.subr.bf16.mxu0 0
        %1345 = vmatpush1.bf16.xpose.msra.mxu0 0
        %1346 = vmatprep.subr.bf16.mxu0 0
        %1347 = vmatpush1.bf16.xpose.msra.mxu0 %v1330
        %1348 = vmatprep.subr.bf16.mxu0 0
        %1349 = vmatpush2.bf16.xpose.msra.mxu0 0
        %1350 = vmatprep.subr.bf16.mxu0 0
        %1351 = vmatpush2.bf16.xpose.msra.mxu0 0
        %1352 = vmatprep.subr.bf16.mxu0 0
        %1353 = vmatpush2.bf16.xpose.msra.mxu0 0
        %1354 = vmatprep.subr.bf16.mxu0 0
        %1355 = vmatpush2.bf16.xpose.msra.mxu0 0
        %1356 = vmatprep.subr.bf16.mxu0 0
        %1357 = vmatpush2.bf16.xpose.msra.mxu0 0
        %1358 = vmatprep.subr.bf16.mxu0 0
        %1359 = vmatpush2.bf16.xpose.msra.mxu0 0
        %1360 = vmatprep.subr.bf16.mxu0 0
        %1361 = vmatpush2.bf16.xpose.msra.mxu0 0
        %1362 = vmatprep.subr.bf16.mxu0 0
        %1363 = vmatpush2.bf16.xpose.msra.mxu0 0
        %1364 = vmatprep.mubr.bf16.mxu0 0
        %1365 = vmatmul.mubr.bf16.gmra.mxu0 %v1327
        %v1366 = vpop.f32.mrf.mxu0
        %v1367 = vadd.f32 %v1277, %v1366
        %v1368 = vpop.f32.mrf.mxu0
        %v1369 = vpop.f32.mrf.mxu0
        %v1370 = vpop.f32.mrf.mxu0
        %1371 = vdwg.mxu0
        %vm1372 = vcmask 64512
        %v1373 = vsel %vm1372, %v1321, -inf
        %1374 = vmax.xlane.f32.xlu0 %v1373
        %v1375 = vpop.xlane.xlu0 %1374
        %v1376 = vsel %vm1372, %v1367, -inf
        %1377 = vmax.xlane.f32.xlu0 %v1376
        %v1378 = vpop.xlane.xlu0 %1377
        %v1379 = vsub.f32 %v1321, %v1375
        %v1380 = vsub.f32 %v1367, %v1378
        %v1381 = vmul.f32 %v1379, 1.442695
        %v1382 = vpow.pop %v1381
        %v1383 = vmul.f32 %v1380, 1.442695
        %v1384 = vpow.pop %v1383
        %v1385 = vsel %vm1372, %v1382, 0.0
        %1386 = vadd.xlane.f32.xlu0 %v1385
        %v1387 = vpop.xlane.xlu0 %1386
        %v1388 = vsel %vm1372, %v1384, 0.0
        %1389 = vadd.xlane.f32.xlu0 %v1388
        %v1390 = vpop.xlane.xlu0 %1389
        %v1391 = vpack.c.bf16 %v1382, %v1382
        %v1392 = vpack.c.bf16 %v1384, %v1384
        %v1393 = vpack.c.bf16 %v1267, %v1267
        %v1394 = vpack.c.bf16 %v1268, %v1268
        %v1396 = vsel %vm1372, %v1391, 0
        %vm1398 = vcmask 1043456
        %v1400 = vsel %vm1398, %v1393, 0
        %1402 = vmatprep.subr.bf16.mxu0 0
        %1403 = vmatpush1.bf16.msra.mxu0 0
        %1404 = vmatprep.subr.bf16.mxu0 0
        %1405 = vmatpush1.bf16.msra.mxu0 0
        %1406 = vmatprep.subr.bf16.mxu0 0
        %1407 = vmatpush1.bf16.msra.mxu0 0
        %1408 = vmatprep.subr.bf16.mxu0 0
        %1409 = vmatpush1.bf16.msra.mxu0 0
        %1410 = vmatprep.subr.bf16.mxu0 0
        %1411 = vmatpush1.bf16.msra.mxu0 0
        %1412 = vmatprep.subr.bf16.mxu0 0
        %1413 = vmatpush1.bf16.msra.mxu0 0
        %1414 = vmatprep.subr.bf16.mxu0 0
        %1415 = vmatpush1.bf16.msra.mxu0 0
        %1416 = vmatprep.subr.bf16.mxu0 0
        %1417 = vmatpush1.bf16.msra.mxu0 %v1400
        %1418 = vmatprep.subr.bf16.mxu0 0
        %1419 = vmatpush2.bf16.msra.mxu0 0
        %1420 = vmatprep.subr.bf16.mxu0 0
        %1421 = vmatpush2.bf16.msra.mxu0 0
        %1422 = vmatprep.subr.bf16.mxu0 0
        %1423 = vmatpush2.bf16.msra.mxu0 0
        %1424 = vmatprep.subr.bf16.mxu0 0
        %1425 = vmatpush2.bf16.msra.mxu0 0
        %1426 = vmatprep.subr.bf16.mxu0 0
        %1427 = vmatpush2.bf16.msra.mxu0 0
        %1428 = vmatprep.subr.bf16.mxu0 0
        %1429 = vmatpush2.bf16.msra.mxu0 0
        %1430 = vmatprep.subr.bf16.mxu0 0
        %1431 = vmatpush2.bf16.msra.mxu0 0
        %1432 = vmatprep.subr.bf16.mxu0 0
        %1433 = vmatpush2.bf16.msra.mxu0 0
        %1434 = vmatprep.mubr.bf16.mxu0 0
        %1435 = vmatmul.mubr.bf16.gmra.mxu0 %v1396
        %v1436 = vpop.f32.mrf.mxu0
        %v1437 = vadd.f32 0.0, %v1436
        %v1438 = vpop.f32.mrf.mxu0
        %v1439 = vpop.f32.mrf.mxu0
        %v1440 = vpop.f32.mrf.mxu0
        %1441 = vdwg.mxu0
        %v1443 = vsel %vm1372, %v1392, 0
        %v1446 = vsel %vm1398, %v1394, 0
        %1448 = vmatprep.subr.bf16.mxu0 0
        %1449 = vmatpush1.bf16.msra.mxu0 0
        %1450 = vmatprep.subr.bf16.mxu0 0
        %1451 = vmatpush1.bf16.msra.mxu0 0
        %1452 = vmatprep.subr.bf16.mxu0 0
        %1453 = vmatpush1.bf16.msra.mxu0 0
        %1454 = vmatprep.subr.bf16.mxu0 0
        %1455 = vmatpush1.bf16.msra.mxu0 0
        %1456 = vmatprep.subr.bf16.mxu0 0
        %1457 = vmatpush1.bf16.msra.mxu0 0
        %1458 = vmatprep.subr.bf16.mxu0 0
        %1459 = vmatpush1.bf16.msra.mxu0 0
        %1460 = vmatprep.subr.bf16.mxu0 0
        %1461 = vmatpush1.bf16.msra.mxu0 0
        %1462 = vmatprep.subr.bf16.mxu0 0
        %1463 = vmatpush1.bf16.msra.mxu0 %v1446
        %1464 = vmatprep.subr.bf16.mxu0 0
        %1465 = vmatpush2.bf16.msra.mxu0 0
        %1466 = vmatprep.subr.bf16.mxu0 0
        %1467 = vmatpush2.bf16.msra.mxu0 0
        %1468 = vmatprep.subr.bf16.mxu0 0
        %1469 = vmatpush2.bf16.msra.mxu0 0
        %1470 = vmatprep.subr.bf16.mxu0 0
        %1471 = vmatpush2.bf16.msra.mxu0 0
        %1472 = vmatprep.subr.bf16.mxu0 0
        %1473 = vmatpush2.bf16.msra.mxu0 0
        %1474 = vmatprep.subr.bf16.mxu0 0
        %1475 = vmatpush2.bf16.msra.mxu0 0
        %1476 = vmatprep.subr.bf16.mxu0 0
        %1477 = vmatpush2.bf16.msra.mxu0 0
        %1478 = vmatprep.subr.bf16.mxu0 0
        %1479 = vmatpush2.bf16.msra.mxu0 0
        %1480 = vmatprep.mubr.bf16.mxu0 0
        %1481 = vmatmul.mubr.bf16.gmra.mxu0 %v1443
        %v1482 = vpop.f32.mrf.mxu0
        %v1483 = vadd.f32 0.0, %v1482
        %v1484 = vpop.f32.mrf.mxu0
        %v1485 = vpop.f32.mrf.mxu0
        %v1486 = vpop.f32.mrf.mxu0
        %1487 = vdwg.mxu0
        %v1488 = vrcp.pop %v1387
        %v1489 = vrcp.pop %v1390
        %v1490 = vmul.f32 %v1437, %v1488
        %v1491 = vmul.f32 %v1483, %v1489
        %v1492 = vcombine.high %v1490, 0.0
        %v1494 = vunpack.c.l.s4 1983009808
        %v1495 = vunpack.c.0.s8 %v1494
        %v1496 = vlaneseq
        %v1497 = vshrl.u32 %v1496, 7
        %v1498 = vsub.s32 %v1495, %v1497
        %v1499 = vrot.slane %v1490, %v1498
        %v1501 = vunpack.c.l.s4 1983009808
        %v1502 = vunpack.c.0.s8 %v1501
        %v1503 = vlaneseq
        %v1504 = vshrl.u32 %v1503, 7
        %v1505 = vsub.s32 %v1502, %v1504
        %v1506 = vrot.slane %v1492, %v1505
        %v1507 = vcombine.high %v1491, 0.0
        %v1509 = vunpack.c.l.s4 1983009808
        %v1510 = vunpack.c.0.s8 %v1509
        %v1511 = vlaneseq
        %v1512 = vshrl.u32 %v1511, 7
        %v1513 = vsub.s32 %v1510, %v1512
        %v1514 = vrot.slane %v1491, %v1513
        %v1516 = vunpack.c.l.s4 1983009808
        %v1517 = vunpack.c.0.s8 %v1516
        %v1518 = vlaneseq
        %v1519 = vshrl.u32 %v1518, 7
        %v1520 = vsub.s32 %v1517, %v1519
        %v1521 = vrot.slane %v1507, %v1520
        %v1522 = vcombine.low %v1499, %v1514
        %v1523 = vcombine.high %v1499, %v1514
        %v1525 = vunpack.c.l.s4 1934713408
        %v1526 = vunpack.c.0.s8 %v1525
        %v1527 = vlaneseq
        %v1528 = vshrl.u32 %v1527, 7
        %v1529 = vsub.s32 %v1526, %v1528
        %v1530 = vrot.slane %v1522, %v1529
        %v1532 = vunpack.c.l.s4 1934713408
        %v1533 = vunpack.c.0.s8 %v1532
        %v1534 = vlaneseq
        %v1535 = vshrl.u32 %v1534, 7
        %v1536 = vsub.s32 %v1533, %v1535
        %v1537 = vrot.slane %v1523, %v1536
        %v1538 = vcombine.low %v1506, %v1521
        %v1539 = vcombine.high %v1506, %v1521
        %v1541 = vunpack.c.l.s4 1934713408
        %v1542 = vunpack.c.0.s8 %v1541
        %v1543 = vlaneseq
        %v1544 = vshrl.u32 %v1543, 7
        %v1545 = vsub.s32 %v1542, %v1544
        %v1546 = vrot.slane %v1538, %v1545
        %v1548 = vunpack.c.l.s4 1934713408
        %v1549 = vunpack.c.0.s8 %v1548
        %v1550 = vlaneseq
        %v1551 = vshrl.u32 %v1550, 7
        %v1552 = vsub.s32 %v1549, %v1551
        %v1553 = vrot.slane %v1539, %v1552
        %v1554 = vcombine.high %v1530, 0.0
        %v1555 = vcombine.high %v1537, 0.0
        %v1556 = vcombine.high %v1546, 0.0
        %v1557 = vcombine.high %v1553, 0.0
        %v1558 = vcombine.low %v1530, %v1537
        %v1560 = vunpack.c.l.s4 1983009808
        %v1561 = vunpack.c.0.s8 %v1560
        %v1562 = vlaneseq
        %v1563 = vshrl.u32 %v1562, 7
        %v1564 = vsub.s32 %v1561, %v1563
        %v1565 = vrot.slane %v1558, %v1564
        %v1566 = vcombine.low %v1554, %v1555
        %v1568 = vunpack.c.l.s4 1983009808
        %v1569 = vunpack.c.0.s8 %v1568
        %v1570 = vlaneseq
        %v1571 = vshrl.u32 %v1570, 7
        %v1572 = vsub.s32 %v1569, %v1571
        %v1573 = vrot.slane %v1566, %v1572
        %v1574 = vcombine.low %v1546, %v1553
        %v1576 = vunpack.c.l.s4 1983009808
        %v1577 = vunpack.c.0.s8 %v1576
        %v1578 = vlaneseq
        %v1579 = vshrl.u32 %v1578, 7
        %v1580 = vsub.s32 %v1577, %v1579
        %v1581 = vrot.slane %v1574, %v1580
        %v1582 = vcombine.low %v1556, %v1557
        %v1584 = vunpack.c.l.s4 1983009808
        %v1585 = vunpack.c.0.s8 %v1584
        %v1586 = vlaneseq
        %v1587 = vshrl.u32 %v1586, 7
        %v1588 = vsub.s32 %v1585, %v1587
        %v1589 = vrot.slane %v1582, %v1588
        %v1590 = vcombine.low %v1565, %v1573
        %v1592 = vunpack.c.l.s4 1934713408
        %v1593 = vunpack.c.0.s8 %v1592
        %v1594 = vlaneseq
        %v1595 = vshrl.u32 %v1594, 7
        %v1596 = vsub.s32 %v1593, %v1595
        %v1597 = vrot.slane %v1590, %v1596
        %v1598 = vcombine.low %v1581, %v1589
        %v1600 = vunpack.c.l.s4 1934713408
        %v1601 = vunpack.c.0.s8 %v1600
        %v1602 = vlaneseq
        %v1603 = vshrl.u32 %v1602, 7
        %v1604 = vsub.s32 %v1601, %v1603
        %v1605 = vrot.slane %v1598, %v1604
        %v1606 = vcombine.low %v1597, %v1605
        %v1607 = vcombine.high %v1597, %v1605
        %1609 = vrot.lane.b32.xlu0 %v1607, 64
        %v1610 = vpop.permute.xlu0 %1609
        %v1612 = vsel %vm1279, %v1606, %v1610
        %v1613 = vpack.c.bf16 %v1612, %v1612
        %v1614 = vlaneseq
        %v1615 = vshrl.u32 %v1614, 7
        %v1616 = vsub.s32 1, %v1615
        %v1617 = vrot.slane %v536, %v1616
        %v1634 = vunpack.c.l.b16 %v572
        %v1635 = vunpack.c.l.b16 %v573
        %v1636 = vunpack.c.l.b16 %v574
        %v1637 = vunpack.c.l.b16 %v575
        %v1638 = vunpack.c.l.b16 %v576
        %v1639 = vunpack.c.l.b16 %v577
        %v1640 = vunpack.c.l.b16 %v578
        %v1641 = vunpack.c.l.b16 %v579
        %v1642 = vunpack.c.l.b16 %v580
        %v1643 = vunpack.c.l.b16 %v581
        %v1644 = vunpack.c.l.b16 %v582
        %v1645 = vunpack.c.l.b16 %v583
        %v1646 = vunpack.c.l.b16 %v584
        %v1647 = vunpack.c.l.b16 %v585
        %v1648 = vunpack.c.l.b16 %v586
        %v1649 = vunpack.c.l.b16 %v587
        %v1650 = vpack.c.b16 %v1635, %v1634
        %v1651 = vpack.c.b16 %v1637, %v1636
        %v1652 = vpack.c.b16 %v1639, %v1638
        %v1653 = vpack.c.b16 %v1641, %v1640
        %v1654 = vpack.c.b16 %v1643, %v1642
        %v1655 = vpack.c.b16 %v1645, %v1644
        %v1656 = vpack.c.b16 %v1647, %v1646
        %v1657 = vpack.c.b16 %v1649, %v1648
        %1666 = vmatprep.subr.bf16.mxu0 0
        %1667 = vmatpush1.bf16.msra.mxu0 %v1657
        %1668 = vmatprep.subr.bf16.mxu0 0
        %1669 = vmatpush1.bf16.msra.mxu0 %v1656
        %1670 = vmatprep.subr.bf16.mxu0 0
        %1671 = vmatpush1.bf16.msra.mxu0 %v1655
        %1672 = vmatprep.subr.bf16.mxu0 0
        %1673 = vmatpush1.bf16.msra.mxu0 %v1654
        %1674 = vmatprep.subr.bf16.mxu0 0
        %1675 = vmatpush1.bf16.msra.mxu0 %v1653
        %1676 = vmatprep.subr.bf16.mxu0 0
        %1677 = vmatpush1.bf16.msra.mxu0 %v1652
        %1678 = vmatprep.subr.bf16.mxu0 0
        %1679 = vmatpush1.bf16.msra.mxu0 %v1651
        %1680 = vmatprep.subr.bf16.mxu0 0
        %1681 = vmatpush1.bf16.msra.mxu0 %v1650
        %1682 = vmatprep.subr.bf16.mxu0 0
        %1683 = vmatpush2.bf16.msra.mxu0 0
        %1684 = vmatprep.subr.bf16.mxu0 0
        %1685 = vmatpush2.bf16.msra.mxu0 0
        %1686 = vmatprep.subr.bf16.mxu0 0
        %1687 = vmatpush2.bf16.msra.mxu0 0
        %1688 = vmatprep.subr.bf16.mxu0 0
        %1689 = vmatpush2.bf16.msra.mxu0 0
        %1690 = vmatprep.subr.bf16.mxu0 0
        %1691 = vmatpush2.bf16.msra.mxu0 0
        %1692 = vmatprep.subr.bf16.mxu0 0
        %1693 = vmatpush2.bf16.msra.mxu0 0
        %1694 = vmatprep.subr.bf16.mxu0 0
        %1695 = vmatpush2.bf16.msra.mxu0 0
        %1696 = vmatprep.subr.bf16.mxu0 0
        %1697 = vmatpush2.bf16.msra.mxu0 0
        %1698 = vmatprep.mubr.bf16.mxu0 0
        %1699 = vmatmul.mubr.bf16.gmra.mxu0 %v1613
        %v1700 = vpop.f32.mrf.mxu0
        %v1701 = vadd.f32 %v1617, %v1700
        %v1702 = vpop.f32.mrf.mxu0
        %v1703 = vpop.f32.mrf.mxu0
        %v1704 = vpop.f32.mrf.mxu0
        %1705 = vdwg.mxu0
        %v1706 = vadd.f32 %v535, %v1701
        %1707 = vadd.xlane.f32.xlu0 %v1706
        %v1708 = vpop.xlane.xlu0 %1707
        %v1709 = vrcp.pop 128.0
        %v1710 = vmul.f32 %v1708, %v1709
        %v1711 = vsub.f32 %v1706, %v1710
        %v1712 = vmul.f32 %v1711, %v1711
        %1713 = vadd.xlane.f32.xlu0 %v1712
        %v1714 = vpop.xlane.xlu0 %1713
        %v1715 = vmul.f32 %v1714, %v1709
        %v1716 = vadd.f32 %v1715, 1e-12
        %v1717 = vrsqrt.pop %v1716
        %v1718 = vmul.f32 %v1711, %v1717
        %v1719 = vlaneseq
        %v1720 = vshrl.u32 %v1719, 7
        %v1721 = vsub.s32 2, %v1720
        %v1722 = vrot.slane %v536, %v1721
        %v1723 = vmul.f32 %v1718, %v1722
        %v1724 = vlaneseq
        %v1725 = vshrl.u32 %v1724, 7
        %v1726 = vsub.s32 3, %v1725
        %v1727 = vrot.slane %v536, %v1726
        %v1728 = vadd.f32 %v1723, %v1727
        %v1729 = vpack.c.bf16 %v1728, %v1728
        %v1730 = vlaneseq
        %v1731 = vshrl.u32 %v1730, 7
        %v1732 = vsub.s32 4, %v1731
        %v1733 = vrot.slane %v536, %v1732
        %v1734 = vlaneseq
        %v1735 = vshrl.u32 %v1734, 7
        %v1736 = vsub.s32 4, %v1735
        %v1737 = vrot.slane %v537, %v1736
        %v1738 = vlaneseq
        %v1739 = vshrl.u32 %v1738, 7
        %v1740 = vsub.s32 4, %v1739
        %v1741 = vrot.slane %v538, %v1740
        %v1742 = vlaneseq
        %v1743 = vshrl.u32 %v1742, 7
        %v1744 = vsub.s32 4, %v1743
        %v1745 = vrot.slane %v539, %v1744
        %v1778 = vunpack.c.l.b16 %v588
        %v1779 = vunpack.c.h.b16 %v588
        %v1780 = vunpack.c.l.b16 %v589
        %v1781 = vunpack.c.h.b16 %v589
        %v1782 = vunpack.c.l.b16 %v590
        %v1783 = vunpack.c.h.b16 %v590
        %v1784 = vunpack.c.l.b16 %v591
        %v1785 = vunpack.c.h.b16 %v591
        %v1786 = vunpack.c.l.b16 %v592
        %v1787 = vunpack.c.h.b16 %v592
        %v1788 = vunpack.c.l.b16 %v593
        %v1789 = vunpack.c.h.b16 %v593
        %v1790 = vunpack.c.l.b16 %v594
        %v1791 = vunpack.c.h.b16 %v594
        %v1792 = vunpack.c.l.b16 %v595
        %v1793 = vunpack.c.h.b16 %v595
        %v1794 = vunpack.c.l.b16 %v596
        %v1795 = vunpack.c.h.b16 %v596
        %v1796 = vunpack.c.l.b16 %v597
        %v1797 = vunpack.c.h.b16 %v597
        %v1798 = vunpack.c.l.b16 %v598
        %v1799 = vunpack.c.h.b16 %v598
        %v1800 = vunpack.c.l.b16 %v599
        %v1801 = vunpack.c.h.b16 %v599
        %v1802 = vunpack.c.l.b16 %v600
        %v1803 = vunpack.c.h.b16 %v600
        %v1804 = vunpack.c.l.b16 %v601
        %v1805 = vunpack.c.h.b16 %v601
        %v1806 = vunpack.c.l.b16 %v602
        %v1807 = vunpack.c.h.b16 %v602
        %v1808 = vunpack.c.l.b16 %v603
        %v1809 = vunpack.c.h.b16 %v603
        %v1810 = vunpack.c.l.b16 %v604
        %v1811 = vunpack.c.h.b16 %v604
        %v1812 = vunpack.c.l.b16 %v605
        %v1813 = vunpack.c.h.b16 %v605
        %v1814 = vunpack.c.l.b16 %v606
        %v1815 = vunpack.c.h.b16 %v606
        %v1816 = vunpack.c.l.b16 %v607
        %v1817 = vunpack.c.h.b16 %v607
        %v1818 = vunpack.c.l.b16 %v608
        %v1819 = vunpack.c.h.b16 %v608
        %v1820 = vunpack.c.l.b16 %v609
        %v1821 = vunpack.c.h.b16 %v609
        %v1822 = vunpack.c.l.b16 %v610
        %v1823 = vunpack.c.h.b16 %v610
        %v1824 = vunpack.c.l.b16 %v611
        %v1825 = vunpack.c.h.b16 %v611
        %v1826 = vunpack.c.l.b16 %v612
        %v1827 = vunpack.c.h.b16 %v612
        %v1828 = vunpack.c.l.b16 %v613
        %v1829 = vunpack.c.h.b16 %v613
        %v1830 = vunpack.c.l.b16 %v614
        %v1831 = vunpack.c.h.b16 %v614
        %v1832 = vunpack.c.l.b16 %v615
        %v1833 = vunpack.c.h.b16 %v615
        %v1834 = vunpack.c.l.b16 %v616
        %v1835 = vunpack.c.h.b16 %v616
        %v1836 = vunpack.c.l.b16 %v617
        %v1837 = vunpack.c.h.b16 %v617
        %v1838 = vunpack.c.l.b16 %v618
        %v1839 = vunpack.c.h.b16 %v618
        %v1840 = vunpack.c.l.b16 %v619
        %v1841 = vunpack.c.h.b16 %v619
        %v1842 = vpack.c.b16 %v1782, %v1778
        %v1843 = vpack.c.b16 %v1783, %v1779
        %v1844 = vpack.c.b16 %v1784, %v1780
        %v1845 = vpack.c.b16 %v1785, %v1781
        %v1846 = vpack.c.b16 %v1790, %v1786
        %v1847 = vpack.c.b16 %v1791, %v1787
        %v1848 = vpack.c.b16 %v1792, %v1788
        %v1849 = vpack.c.b16 %v1793, %v1789
        %v1850 = vpack.c.b16 %v1798, %v1794
        %v1851 = vpack.c.b16 %v1799, %v1795
        %v1852 = vpack.c.b16 %v1800, %v1796
        %v1853 = vpack.c.b16 %v1801, %v1797
        %v1854 = vpack.c.b16 %v1806, %v1802
        %v1855 = vpack.c.b16 %v1807, %v1803
        %v1856 = vpack.c.b16 %v1808, %v1804
        %v1857 = vpack.c.b16 %v1809, %v1805
        %v1858 = vpack.c.b16 %v1814, %v1810
        %v1859 = vpack.c.b16 %v1815, %v1811
        %v1860 = vpack.c.b16 %v1816, %v1812
        %v1861 = vpack.c.b16 %v1817, %v1813
        %v1862 = vpack.c.b16 %v1822, %v1818
        %v1863 = vpack.c.b16 %v1823, %v1819
        %v1864 = vpack.c.b16 %v1824, %v1820
        %v1865 = vpack.c.b16 %v1825, %v1821
        %v1866 = vpack.c.b16 %v1830, %v1826
        %v1867 = vpack.c.b16 %v1831, %v1827
        %v1868 = vpack.c.b16 %v1832, %v1828
        %v1869 = vpack.c.b16 %v1833, %v1829
        %v1870 = vpack.c.b16 %v1838, %v1834
        %v1871 = vpack.c.b16 %v1839, %v1835
        %v1872 = vpack.c.b16 %v1840, %v1836
        %v1873 = vpack.c.b16 %v1841, %v1837
        %1906 = vmatprep.subr.bf16.mxu0 %v1871
        %1907 = vmatpush1.bf16.msra.mxu0 %v1870
        %1908 = vmatprep.subr.bf16.mxu0 %v1867
        %1909 = vmatpush1.bf16.msra.mxu0 %v1866
        %1910 = vmatprep.subr.bf16.mxu0 %v1863
        %1911 = vmatpush1.bf16.msra.mxu0 %v1862
        %1912 = vmatprep.subr.bf16.mxu0 %v1859
        %1913 = vmatpush1.bf16.msra.mxu0 %v1858
        %1914 = vmatprep.subr.bf16.mxu0 %v1855
        %1915 = vmatpush1.bf16.msra.mxu0 %v1854
        %1916 = vmatprep.subr.bf16.mxu0 %v1851
        %1917 = vmatpush1.bf16.msra.mxu0 %v1850
        %1918 = vmatprep.subr.bf16.mxu0 %v1847
        %1919 = vmatpush1.bf16.msra.mxu0 %v1846
        %1920 = vmatprep.subr.bf16.mxu0 %v1843
        %1921 = vmatpush1.bf16.msra.mxu0 %v1842
        %1922 = vmatprep.subr.bf16.mxu0 0
        %1923 = vmatpush2.bf16.msra.mxu0 0
        %1924 = vmatprep.subr.bf16.mxu0 0
        %1925 = vmatpush2.bf16.msra.mxu0 0
        %1926 = vmatprep.subr.bf16.mxu0 0
        %1927 = vmatpush2.bf16.msra.mxu0 0
        %1928 = vmatprep.subr.bf16.mxu0 0
        %1929 = vmatpush2.bf16.msra.mxu0 0
        %1930 = vmatprep.subr.bf16.mxu0 0
        %1931 = vmatpush2.bf16.msra.mxu0 0
        %1932 = vmatprep.subr.bf16.mxu0 0
        %1933 = vmatpush2.bf16.msra.mxu0 0
        %1934 = vmatprep.subr.bf16.mxu0 0
        %1935 = vmatpush2.bf16.msra.mxu0 0
        %1936 = vmatprep.subr.bf16.mxu0 0
        %1937 = vmatpush2.bf16.msra.mxu0 0
        %1938 = vmatprep.mubr.bf16.mxu0 0
        %1939 = vmatmul.mubr.bf16.gmra.mxu0 %v1729
        %v1940 = vpop.f32.mrf.mxu0
        %v1941 = vadd.f32 %v1733, %v1940
        %v1942 = vpop.f32.mrf.mxu0
        %v1943 = vadd.f32 %v1737, %v1942
        %v1944 = vpop.f32.mrf.mxu0
        %v1945 = vpop.f32.mrf.mxu0
        %1946 = vdwg.mxu0
        %1947 = vmatprep.subr.bf16.mxu0 %v1873
        %1948 = vmatpush1.bf16.msra.mxu0 %v1872
        %1949 = vmatprep.subr.bf16.mxu0 %v1869
        %1950 = vmatpush1.bf16.msra.mxu0 %v1868
        %1951 = vmatprep.subr.bf16.mxu0 %v1865
        %1952 = vmatpush1.bf16.msra.mxu0 %v1864
        %1953 = vmatprep.subr.bf16.mxu0 %v1861
        %1954 = vmatpush1.bf16.msra.mxu0 %v1860
        %1955 = vmatprep.subr.bf16.mxu0 %v1857
        %1956 = vmatpush1.bf16.msra.mxu0 %v1856
        %1957 = vmatprep.subr.bf16.mxu0 %v1853
        %1958 = vmatpush1.bf16.msra.mxu0 %v1852
        %1959 = vmatprep.subr.bf16.mxu0 %v1849
        %1960 = vmatpush1.bf16.msra.mxu0 %v1848
        %1961 = vmatprep.subr.bf16.mxu0 %v1845
        %1962 = vmatpush1.bf16.msra.mxu0 %v1844
        %1963 = vmatprep.subr.bf16.mxu0 0
        %1964 = vmatpush2.bf16.msra.mxu0 0
        %1965 = vmatprep.subr.bf16.mxu0 0
        %1966 = vmatpush2.bf16.msra.mxu0 0
        %1967 = vmatprep.subr.bf16.mxu0 0
        %1968 = vmatpush2.bf16.msra.mxu0 0
        %1969 = vmatprep.subr.bf16.mxu0 0
        %1970 = vmatpush2.bf16.msra.mxu0 0
        %1971 = vmatprep.subr.bf16.mxu0 0
        %1972 = vmatpush2.bf16.msra.mxu0 0
        %1973 = vmatprep.subr.bf16.mxu0 0
        %1974 = vmatpush2.bf16.msra.mxu0 0
        %1975 = vmatprep.subr.bf16.mxu0 0
        %1976 = vmatpush2.bf16.msra.mxu0 0
        %1977 = vmatprep.subr.bf16.mxu0 0
        %1978 = vmatpush2.bf16.msra.mxu0 0
        %1979 = vmatprep.mubr.bf16.mxu0 0
        %1980 = vmatmul.mubr.bf16.gmra.mxu0 %v1729
        %v1981 = vpop.f32.mrf.mxu0
        %v1982 = vadd.f32 %v1741, %v1981
        %v1983 = vpop.f32.mrf.mxu0
        %v1984 = vadd.f32 %v1745, %v1983
        %v1985 = vpop.f32.mrf.mxu0
        %v1986 = vpop.f32.mrf.mxu0
        %1987 = vdwg.mxu0
        %v1988 = vmul.f32 %v1941, 0.5
        %v1989 = vmul.f32 %v1943, 0.5
        %v1990 = vmul.f32 %v1982, 0.5
        %v1991 = vmul.f32 %v1984, 0.5
        %v1992 = vmul.f32 %v1941, 0.044715
        %v1993 = vmul.f32 %v1943, 0.044715
        %v1994 = vmul.f32 %v1982, 0.044715
        %v1995 = vmul.f32 %v1984, 0.044715
        %v1996 = vmul.f32 %v1992, %v1941
        %v1997 = vmul.f32 %v1993, %v1943
        %v1998 = vmul.f32 %v1994, %v1982
        %v1999 = vmul.f32 %v1995, %v1984
        %v2000 = vmul.f32 %v1996, %v1941
        %v2001 = vmul.f32 %v1997, %v1943
        %v2002 = vmul.f32 %v1998, %v1982
        %v2003 = vmul.f32 %v1999, %v1984
        %v2004 = vadd.f32 %v1941, %v2000
        %v2005 = vadd.f32 %v1943, %v2001
        %v2006 = vadd.f32 %v1982, %v2002
        %v2007 = vadd.f32 %v1984, %v2003
        %v2008 = vmul.f32 %v2004, 0.7978846
        %v2009 = vmul.f32 %v2005, 0.7978846
        %v2010 = vmul.f32 %v2006, 0.7978846
        %v2011 = vmul.f32 %v2007, 0.7978846
        %v2012 = vtanh.pop %v2008
        %v2013 = vtanh.pop %v2009
        %v2014 = vtanh.pop %v2010
        %v2015 = vtanh.pop %v2011
        %v2016 = vadd.f32 %v2012, 1.0
        %v2017 = vadd.f32 %v2013, 1.0
        %v2018 = vadd.f32 %v2014, 1.0
        %v2019 = vadd.f32 %v2015, 1.0
        %v2020 = vmul.f32 %v1988, %v2016
        %v2021 = vmul.f32 %v1989, %v2017
        %v2022 = vmul.f32 %v1990, %v2018
        %v2023 = vmul.f32 %v1991, %v2019
        %v2024 = vpack.c.bf16 %v2020, %v2020
        %v2025 = vpack.c.bf16 %v2021, %v2021
        %v2026 = vpack.c.bf16 %v2022, %v2022
        %v2027 = vpack.c.bf16 %v2023, %v2023
        %v2028 = vlaneseq
        %v2029 = vshrl.u32 %v2028, 7
        %v2030 = vsub.s32 5, %v2029
        %v2031 = vrot.slane %v536, %v2030
        %v2096 = vunpack.c.l.b16 %v620
        %v2097 = vunpack.c.l.b16 %v621
        %v2098 = vunpack.c.l.b16 %v622
        %v2099 = vunpack.c.l.b16 %v623
        %v2100 = vunpack.c.l.b16 %v624
        %v2101 = vunpack.c.l.b16 %v625
        %v2102 = vunpack.c.l.b16 %v626
        %v2103 = vunpack.c.l.b16 %v627
        %v2104 = vunpack.c.l.b16 %v628
        %v2105 = vunpack.c.l.b16 %v629
        %v2106 = vunpack.c.l.b16 %v630
        %v2107 = vunpack.c.l.b16 %v631
        %v2108 = vunpack.c.l.b16 %v632
        %v2109 = vunpack.c.l.b16 %v633
        %v2110 = vunpack.c.l.b16 %v634
        %v2111 = vunpack.c.l.b16 %v635
        %v2112 = vunpack.c.l.b16 %v636
        %v2113 = vunpack.c.l.b16 %v637
        %v2114 = vunpack.c.l.b16 %v638
        %v2115 = vunpack.c.l.b16 %v639
        %v2116 = vunpack.c.l.b16 %v640
        %v2117 = vunpack.c.l.b16 %v641
        %v2118 = vunpack.c.l.b16 %v642
        %v2119 = vunpack.c.l.b16 %v643
        %v2120 = vunpack.c.l.b16 %v644
        %v2121 = vunpack.c.l.b16 %v645
        %v2122 = vunpack.c.l.b16 %v646
        %v2123 = vunpack.c.l.b16 %v647
        %v2124 = vunpack.c.l.b16 %v648
        %v2125 = vunpack.c.l.b16 %v649
        %v2126 = vunpack.c.l.b16 %v650
        %v2127 = vunpack.c.l.b16 %v651
        %v2128 = vunpack.c.l.b16 %v652
        %v2129 = vunpack.c.l.b16 %v653
        %v2130 = vunpack.c.l.b16 %v654
        %v2131 = vunpack.c.l.b16 %v655
        %v2132 = vunpack.c.l.b16 %v656
        %v2133 = vunpack.c.l.b16 %v657
        %v2134 = vunpack.c.l.b16 %v658
        %v2135 = vunpack.c.l.b16 %v659
        %v2136 = vunpack.c.l.b16 %v660
        %v2137 = vunpack.c.l.b16 %v661
        %v2138 = vunpack.c.l.b16 %v662
        %v2139 = vunpack.c.l.b16 %v663
        %v2140 = vunpack.c.l.b16 %v664
        %v2141 = vunpack.c.l.b16 %v665
        %v2142 = vunpack.c.l.b16 %v666
        %v2143 = vunpack.c.l.b16 %v667
        %v2144 = vunpack.c.l.b16 %v668
        %v2145 = vunpack.c.l.b16 %v669
        %v2146 = vunpack.c.l.b16 %v670
        %v2147 = vunpack.c.l.b16 %v671
        %v2148 = vunpack.c.l.b16 %v672
        %v2149 = vunpack.c.l.b16 %v673
        %v2150 = vunpack.c.l.b16 %v674
        %v2151 = vunpack.c.l.b16 %v675
        %v2152 = vunpack.c.l.b16 %v676
        %v2153 = vunpack.c.l.b16 %v677
        %v2154 = vunpack.c.l.b16 %v678
        %v2155 = vunpack.c.l.b16 %v679
        %v2156 = vunpack.c.l.b16 %v680
        %v2157 = vunpack.c.l.b16 %v681
        %v2158 = vunpack.c.l.b16 %v682
        %v2159 = vunpack.c.l.b16 %v683
        %v2160 = vpack.c.b16 %v2097, %v2096
        %v2161 = vpack.c.b16 %v2099, %v2098
        %v2162 = vpack.c.b16 %v2101, %v2100
        %v2163 = vpack.c.b16 %v2103, %v2102
        %v2164 = vpack.c.b16 %v2105, %v2104
        %v2165 = vpack.c.b16 %v2107, %v2106
        %v2166 = vpack.c.b16 %v2109, %v2108
        %v2167 = vpack.c.b16 %v2111, %v2110
        %v2168 = vpack.c.b16 %v2113, %v2112
        %v2169 = vpack.c.b16 %v2115, %v2114
        %v2170 = vpack.c.b16 %v2117, %v2116
        %v2171 = vpack.c.b16 %v2119, %v2118
        %v2172 = vpack.c.b16 %v2121, %v2120
        %v2173 = vpack.c.b16 %v2123, %v2122
        %v2174 = vpack.c.b16 %v2125, %v2124
        %v2175 = vpack.c.b16 %v2127, %v2126
        %v2176 = vpack.c.b16 %v2129, %v2128
        %v2177 = vpack.c.b16 %v2131, %v2130
        %v2178 = vpack.c.b16 %v2133, %v2132
        %v2179 = vpack.c.b16 %v2135, %v2134
        %v2180 = vpack.c.b16 %v2137, %v2136
        %v2181 = vpack.c.b16 %v2139, %v2138
        %v2182 = vpack.c.b16 %v2141, %v2140
        %v2183 = vpack.c.b16 %v2143, %v2142
        %v2184 = vpack.c.b16 %v2145, %v2144
        %v2185 = vpack.c.b16 %v2147, %v2146
        %v2186 = vpack.c.b16 %v2149, %v2148
        %v2187 = vpack.c.b16 %v2151, %v2150
        %v2188 = vpack.c.b16 %v2153, %v2152
        %v2189 = vpack.c.b16 %v2155, %v2154
        %v2190 = vpack.c.b16 %v2157, %v2156
        %v2191 = vpack.c.b16 %v2159, %v2158
        %2224 = vmatprep.subr.bf16.mxu0 0
        %2225 = vmatpush1.bf16.msra.mxu0 %v2167
        %2226 = vmatprep.subr.bf16.mxu0 0
        %2227 = vmatpush1.bf16.msra.mxu0 %v2166
        %2228 = vmatprep.subr.bf16.mxu0 0
        %2229 = vmatpush1.bf16.msra.mxu0 %v2165
        %2230 = vmatprep.subr.bf16.mxu0 0
        %2231 = vmatpush1.bf16.msra.mxu0 %v2164
        %2232 = vmatprep.subr.bf16.mxu0 0
        %2233 = vmatpush1.bf16.msra.mxu0 %v2163
        %2234 = vmatprep.subr.bf16.mxu0 0
        %2235 = vmatpush1.bf16.msra.mxu0 %v2162
        %2236 = vmatprep.subr.bf16.mxu0 0
        %2237 = vmatpush1.bf16.msra.mxu0 %v2161
        %2238 = vmatprep.subr.bf16.mxu0 0
        %2239 = vmatpush1.bf16.msra.mxu0 %v2160
        %2240 = vmatprep.subr.bf16.mxu0 0
        %2241 = vmatpush2.bf16.msra.mxu0 %v2175
        %2242 = vmatprep.subr.bf16.mxu0 0
        %2243 = vmatpush2.bf16.msra.mxu0 %v2174
        %2244 = vmatprep.subr.bf16.mxu0 0
        %2245 = vmatpush2.bf16.msra.mxu0 %v2173
        %2246 = vmatprep.subr.bf16.mxu0 0
        %2247 = vmatpush2.bf16.msra.mxu0 %v2172
        %2248 = vmatprep.subr.bf16.mxu0 0
        %2249 = vmatpush2.bf16.msra.mxu0 %v2171
        %2250 = vmatprep.subr.bf16.mxu0 0
        %2251 = vmatpush2.bf16.msra.mxu0 %v2170
        %2252 = vmatprep.subr.bf16.mxu0 0
        %2253 = vmatpush2.bf16.msra.mxu0 %v2169
        %2254 = vmatprep.subr.bf16.mxu0 0
        %2255 = vmatpush2.bf16.msra.mxu0 %v2168
        %2256 = vmatprep.mubr.bf16.mxu0 %v2025
        %2257 = vmatmul.mubr.bf16.gmra.mxu0 %v2024
        %v2258 = vpop.f32.mrf.mxu0
        %v2259 = vadd.f32 %v2031, %v2258
        %v2260 = vpop.f32.mrf.mxu0
        %v2261 = vpop.f32.mrf.mxu0
        %v2262 = vpop.f32.mrf.mxu0
        %2263 = vdwg.mxu0
        %2264 = vmatprep.subr.bf16.mxu0 0
        %2265 = vmatpush1.bf16.msra.mxu0 %v2183
        %2266 = vmatprep.subr.bf16.mxu0 0
        %2267 = vmatpush1.bf16.msra.mxu0 %v2182
        %2268 = vmatprep.subr.bf16.mxu0 0
        %2269 = vmatpush1.bf16.msra.mxu0 %v2181
        %2270 = vmatprep.subr.bf16.mxu0 0
        %2271 = vmatpush1.bf16.msra.mxu0 %v2180
        %2272 = vmatprep.subr.bf16.mxu0 0
        %2273 = vmatpush1.bf16.msra.mxu0 %v2179
        %2274 = vmatprep.subr.bf16.mxu0 0
        %2275 = vmatpush1.bf16.msra.mxu0 %v2178
        %2276 = vmatprep.subr.bf16.mxu0 0
        %2277 = vmatpush1.bf16.msra.mxu0 %v2177
        %2278 = vmatprep.subr.bf16.mxu0 0
        %2279 = vmatpush1.bf16.msra.mxu0 %v2176
        %2280 = vmatprep.subr.bf16.mxu0 0
        %2281 = vmatpush2.bf16.msra.mxu0 %v2191
        %2282 = vmatprep.subr.bf16.mxu0 0
        %2283 = vmatpush2.bf16.msra.mxu0 %v2190
        %2284 = vmatprep.subr.bf16.mxu0 0
        %2285 = vmatpush2.bf16.msra.mxu0 %v2189
        %2286 = vmatprep.subr.bf16.mxu0 0
        %2287 = vmatpush2.bf16.msra.mxu0 %v2188
        %2288 = vmatprep.subr.bf16.mxu0 0
        %2289 = vmatpush2.bf16.msra.mxu0 %v2187
        %2290 = vmatprep.subr.bf16.mxu0 0
        %2291 = vmatpush2.bf16.msra.mxu0 %v2186
        %2292 = vmatprep.subr.bf16.mxu0 0
        %2293 = vmatpush2.bf16.msra.mxu0 %v2185
        %2294 = vmatprep.subr.bf16.mxu0 0
        %2295 = vmatpush2.bf16.msra.mxu0 %v2184
        %2296 = vmatprep.mubr.bf16.mxu0 %v2027
        %2297 = vmatmul.mubr.bf16.gmra.mxu0 %v2026
        %v2298 = vpop.f32.mrf.mxu0
        %v2299 = vadd.f32 %v2259, %v2298
        %v2300 = vpop.f32.mrf.mxu0
        %v2301 = vpop.f32.mrf.mxu0
        %v2302 = vpop.f32.mrf.mxu0
        %2303 = vdwg.mxu0
        %v2304 = vadd.f32 %v1728, %v2299
        %2305 = vadd.xlane.f32.xlu0 %v2304
        %v2306 = vpop.xlane.xlu0 %2305
        %v2307 = vmul.f32 %v2306, %v1709
        %v2308 = vsub.f32 %v2304, %v2307
        %v2309 = vmul.f32 %v2308, %v2308
        %2310 = vadd.xlane.f32.xlu0 %v2309
        %v2311 = vpop.xlane.xlu0 %2310
        %v2312 = vmul.f32 %v2311, %v1709
        %v2313 = vadd.f32 %v2312, 1e-12
        %v2314 = vrsqrt.pop %v2313
        %v2315 = vmul.f32 %v2308, %v2314
        %v2316 = vlaneseq
        %v2317 = vshrl.u32 %v2316, 7
        %v2318 = vsub.s32 6, %v2317
        %v2319 = vrot.slane %v536, %v2318
        %v2320 = vmul.f32 %v2315, %v2319
        %v2321 = vlaneseq
        %v2322 = vshrl.u32 %v2321, 7
        %v2323 = vsub.s32 7, %v2322
        %v2324 = vrot.slane %v536, %v2323
        %v2325 = vadd.f32 %v2320, %v2324
        %2326 = vst [vmem:[#allocation2] sm:$0xff] %v2325
        %p2327 = scmp.eq.s32.totalorder %s38, 1
        // Predicated region
        $region81: #{tpu_custom_call.1} parent=47 // pred_check
          %p2328 = pneg %p2327
        $region82: #{tpu_custom_call.1} parent=47 // pred_check_branch
          %2330 = sbr.rel (%p2328) target = $region84
        $region83: #{tpu_custom_call.1} parent=47 // pred_region
          %2331 = vst [vmem:[%s527] sm:$0x1] %v2325
        $region84: #{tpu_custom_call.1} parent=47 // pred_fallthru
          _
        %s2332 = sand.u32 %s235, 1
        %s2333 = scalar_lea.sflag [#allocation5], %s2332
        %s2334 = sand.u32 %s235, 1
        %s2335 = scalar_lea.vmem [#allocation15], %s2334
        // Predicated region
        $region85: #{tpu_custom_call.1} parent=47 // pred_check
          %p2336 = pneg %p245
        $region86: #{tpu_custom_call.1} parent=47 // pred_check_branch
          %2338 = sbr.rel (%p2336) target = $region88
        $region87: #{tpu_custom_call.1} parent=47 // pred_region
          %s2340 = ssub.s32 16, 16
          %2341 = vsyncadd %s2333, %s2340
          %s2342 = smul.addr %s37, 16
          %s2343 = scalar_lea.hbm %s7, %s2342
          %s2345 = sshll.u32 %s2335, 4
          %s2346 = int_to_ptr.vmem [resolvable:$true] %s2345
          %2348 = dma.vmem_to_hbm [thread:$0]  %s2346, 16, %s2343, %s2333
        $region88: #{tpu_custom_call.1} parent=47 // pred_fallthru
          _
      $region48: #{tpu_custom_call.1} parent=5 // pred_fallthru
        _
      %p2349 = scmp.le.s32.totalorder 2, %s28
      // Predicated region
      $region89: #{tpu_custom_call.1} parent=5 // pred_check
        %p2350 = pneg %p2349
      $region90: #{tpu_custom_call.1} parent=5 // pred_check_branch
        %2352 = sbr.rel (%p2350) target = $region92
      $region91: #{tpu_custom_call.1} parent=5 // pred_region
        %s2353 = ssub.s32 %s28, 2
        // Predicated region
        $region93: #{tpu_custom_call.1} parent=91 // pred_check
          %p2354 = pneg %p251
        $region94: #{tpu_custom_call.1} parent=91 // pred_check_branch
          %2356 = sbr.rel (%p2354) target = $region96
        $region95: #{tpu_custom_call.1} parent=91 // pred_region
          %s2357 = sand.u32 %s236, 1
          %s2358 = scalar_lea.sflag [#allocation5], %s2357
          %s2359 = sand.u32 %s236, 1
          %s2360 = scalar_lea.vmem [#allocation15], %s2359
          %2361 = dma.done %s2358, 16
        $region96: #{tpu_custom_call.1} parent=91 // pred_fallthru
          _
      $region92: #{tpu_custom_call.1} parent=5 // pred_fallthru
        _
    $region6: #{tpu_custom_call.1} parent=1 // loop_footer
      %s32 = sadd.s32 1, %s28
    $region7: #{tpu_custom_call.1} parent=1 // loop_footer_branch
      %27 = sbr.rel target = $region3
    $region8: #{tpu_custom_call.1} parent=1 // loop_exit
      _
    %2362 = vsyncpa [#allocation4], 1
    %s2363 = scalar_lea.sflag [#allocation4], 1
    %2364 = vsyncpa %s2363, 1
    %2365 = vsyncpa [#allocation7], 1
    %s2366 = scalar_lea.sflag [#allocation7], 1
    %2367 = vsyncpa %s2366, 1
    %2368 = vsyncpa [#allocation10], 1
    %s2369 = scalar_lea.sflag [#allocation10], 1
    %2370 = vsyncpa %s2369, 1
    %2371 = vsyncpa [#allocation13], 1
    %s2372 = scalar_lea.sflag [#allocation13], 1
    %2373 = vsyncpa %s2372, 1
    %2374 = vsyncpa [#allocation5], 1
    %s2375 = scalar_lea.sflag [#allocation5], 1
    %2376 = vsyncpa %s2375, 1

</llo_original>
